<compile_context>
chip_gen: v6e
topology: v6e:2x2x1
jax: 0.10.0
libtpu: 0.0.40
codegen_flags: <defaults>
</compile_context>

<pallas_src>
import jax
import jax.numpy as jnp
from jax.experimental import pallas as pl
from jax.experimental.pallas import tpu as pltpu

ENC_HIDDEN = 768      # bert-base-uncased hidden_size
HIDDEN_DIM = 384      # hidden_dim
NUMERIC_DIM = 8       # numeric_dim
HALF_DIM = HIDDEN_DIM // 2   # 192
OUT_DIM = 384
LN_EPS = 1e-5

TB_MAX = 256          # batch tile cap (past the ~85% pipeline-efficiency knee)


def _cdiv(a, b):
    return (a + b - 1) // b


def _round_up(x, m):
    return _cdiv(x, m) * m


def _semiotic_kernel(pooled_ref, numeric_ref,
                     w1_ref, b1_ref,
                     wn_ref, bn_ref,
                     wc_text_ref, wc_num_ref, bc_ref,
                     gamma_ref, beta_ref,
                     out_ref):
    # ---- text branch: fc1 (bf16 MXU matmul, f32 accumulate) + f32 tanh ----
    # f32 -> bf16 cast happens here (VALU), not as a separate XLA HBM pass.
    pooled_bf16 = pooled_ref[...].astype(jnp.bfloat16)
    text = jnp.tanh(
        jnp.dot(pooled_bf16, w1_ref[...], preferred_element_type=jnp.float32)
        + b1_ref[...]
    )
    # dropout(p=0.1) -> identity in inference mode.
    # TODO(synk): training-mode dropout mask not implemented (eval semantics).

    # ---- numeric branch: tiny K=8 contraction as a plain MXU dot (f32).
    #      The MXU has slack here; this avoids 8 cross-lane broadcast MACs. ----
    num = jnp.tanh(
        jnp.dot(numeric_ref[...], wn_ref[...], preferred_element_type=jnp.float32)
        + bn_ref[...]
    )

    # ---- fc_combined over cat([text, numeric], dim=1) as a split matmul:
    #      cat([t, n]) @ Wc == t @ Wc[:384] + n @ Wc[384:]  (no concat materialized)
    out = (
        jnp.dot(text.astype(jnp.bfloat16), wc_text_ref[...],
                preferred_element_type=jnp.float32)
        + jnp.dot(num.astype(jnp.bfloat16), wc_num_ref[...],
                  preferred_element_type=jnp.float32)
        + bc_ref[...]
    )

    # ---- LayerNorm over the last (384) axis, f32 math ----
    mean = jnp.mean(out, axis=-1, keepdims=True)
    centered = out - mean
    var = jnp.mean(centered * centered, axis=-1, keepdims=True)
    inv = jax.lax.rsqrt(var + LN_EPS)
    out_ref[...] = (centered * inv) * gamma_ref[...] + beta_ref[...]


@jax.jit
def semiotic_extractor_forward(pooled, numeric_values, params):
    """pooled: [B, 768] f32, numeric_values: [B, 8] f32 -> [B, 384] f32."""
    b = pooled.shape[0]

    if b <= 32:
        # Single exact block: a block dim equal to the full array dim is always
        # legal, avoids any masked edge tile for the tiny-batch path.
        tb = b
    else:
        # Tile of at most 256 rows, >=2 grid steps (megacore on v7x), 16-row
        # aligned for bf16 sublane packing of the intermediates.
        tb = min(TB_MAX, _round_up(_cdiv(b, 2), 16))
    grid = (_cdiv(b, tb),)

    def pinned(shape):
        # Weight/bias block: index never changes -> stays VMEM-resident across tiles.
        return pl.BlockSpec(shape, lambda i: (0, 0))

    # Advisory cost estimate so XLA overlaps neighbors with this call.
    flops = 2 * b * (ENC_HIDDEN * HIDDEN_DIM + NUMERIC_DIM * HALF_DIM
                     + HIDDEN_DIM * OUT_DIM + HALF_DIM * OUT_DIM)
    transcendentals = b * (HIDDEN_DIM + HALF_DIM + 1)   # tanh + rsqrt
    weight_bytes = (params["w1"].size + params["wc_text"].size
                    + params["wc_num"].size) * 2 + (
        params["wn"].size + params["b1"].size + params["bn"].size
        + params["bc"].size + params["gamma"].size + params["beta"].size) * 4
    bytes_accessed = weight_bytes + b * (ENC_HIDDEN * 4 + NUMERIC_DIM * 4
                                         + OUT_DIM * 4)

    return pl.pallas_call(
        _semiotic_kernel,
        out_shape=jax.ShapeDtypeStruct((b, OUT_DIM), jnp.float32),
        grid=grid,
        in_specs=[
            pl.BlockSpec((tb, ENC_HIDDEN), lambda i: (i, 0)),     # pooled tile (f32)
            pl.BlockSpec((tb, NUMERIC_DIM), lambda i: (i, 0)),    # numeric tile (f32)
            pinned((ENC_HIDDEN, HIDDEN_DIM)),                     # W1 (bf16)
            pinned((1, HIDDEN_DIM)),                              # b1
            pinned((NUMERIC_DIM, HALF_DIM)),                      # Wn (f32)
            pinned((1, HALF_DIM)),                                # bn
            pinned((HIDDEN_DIM, OUT_DIM)),                        # Wc_text (bf16)
            pinned((HALF_DIM, OUT_DIM)),                          # Wc_num (bf16)
            pinned((1, OUT_DIM)),                                 # bc
            pinned((1, OUT_DIM)),                                 # gamma
            pinned((1, OUT_DIM)),                                 # beta
        ],
        out_specs=pl.BlockSpec((tb, OUT_DIM), lambda i: (i, 0)),
        compiler_params=pltpu.CompilerParams(
            dimension_semantics=("parallel",),
        ),
        cost_estimate=pl.CostEstimate(
            flops=flops,
            transcendentals=transcendentals,
            bytes_accessed=bytes_accessed,
        ),
    )(
        pooled, numeric_values,
        params["w1"], params["b1"],
        params["wn"], params["bn"],
        params["wc_text"], params["wc_num"], params["bc"],
        params["gamma"], params["beta"],
    )


def init_params(key):
    """Deterministic synthetic init; weights stored as [in, out] (transposed vs
    PyTorch). The big matmul operands are stored in bf16 ONCE here, so there is
    no per-call cast pass over the weights."""
    ks = jax.random.split(key, 6)
    scale = 0.02
    w1 = scale * jax.random.normal(ks[0], (ENC_HIDDEN, HIDDEN_DIM), jnp.float32)
    b1 = scale * jax.random.normal(ks[1], (1, HIDDEN_DIM), jnp.float32)
    wn = scale * jax.random.normal(ks[2], (NUMERIC_DIM, HALF_DIM), jnp.float32)
    bn = scale * jax.random.normal(ks[3], (1, HALF_DIM), jnp.float32)
    wc = scale * jax.random.normal(ks[4], (HIDDEN_DIM + HALF_DIM, OUT_DIM), jnp.float32)
    bc = scale * jax.random.normal(ks[5], (1, OUT_DIM), jnp.float32)
    return {
        "w1": w1.astype(jnp.bfloat16),
        "b1": b1,
        "wn": wn, "bn": bn,
        "wc_text": wc[:HIDDEN_DIM].astype(jnp.bfloat16),   # rows for text features
        "wc_num": wc[HIDDEN_DIM:].astype(jnp.bfloat16),    # rows for numeric features
        "bc": bc,
        "gamma": jnp.ones((1, OUT_DIM), jnp.float32),      # LayerNorm default init
        "beta": jnp.zeros((1, OUT_DIM), jnp.float32),
    }


def reference_forward(pooled, numeric_values, params):
    """Plain-JAX reference mirroring the kernel's mixed-precision recipe
    (bf16 matmul operands, f32 accumulation, f32 tanh/LayerNorm)."""
    bf = lambda x: x.astype(jnp.bfloat16)
    text = jnp.tanh(
        jnp.dot(bf(pooled), params["w1"], preferred_element_type=jnp.float32)
        + params["b1"])
    num = jnp.tanh(
        jnp.dot(numeric_values, params["wn"], preferred_element_type=jnp.float32)
        + params["bn"])
    out = (jnp.dot(bf(text), params["wc_text"], preferred_element_type=jnp.float32)
           + jnp.dot(bf(num), params["wc_num"], preferred_element_type=jnp.float32)
           + params["bc"])
    mean = out.mean(-1, keepdims=True)
    var = ((out - mean) ** 2).mean(-1, keepdims=True)
    return (out - mean) * jax.lax.rsqrt(var + LN_EPS) * params["gamma"] + params["beta"]


if __name__ == "__main__":
    key = jax.random.PRNGKey(0)
    k_param = jax.random.fold_in(key, 0)
    params = init_params(k_param)

    # B=2 exercises the exact single-block path; B=40 exercises the multi-tile
    # grid (tb=32, grid=2) with a masked ragged edge tile.
    for B in (2, 40):
        k_pool = jax.random.fold_in(key, 10 + B)
        k_num = jax.random.fold_in(key, 20 + B)
        # Synthetic stand-in for transformer_model(...).last_hidden_state[:, 0, :]
        pooled = jax.random.normal(k_pool, (B, ENC_HIDDEN), jnp.float32)
        numeric_values = jax.random.normal(k_num, (B, NUMERIC_DIM), jnp.float32)

        out = jax.block_until_ready(
            semiotic_extractor_forward(pooled, numeric_values, params))
        ref = jax.block_until_ready(
            reference_forward(pooled, numeric_values, params))

        assert out.shape == (B, OUT_DIM), out.shape
        max_err = float(jnp.max(jnp.abs(out - ref)))
        assert jnp.allclose(out, ref, atol=2e-2, rtol=2e-2), (
            f"B={B}: mismatch vs reference, max_err={max_err}")

    print("KERNEL_OK")
</pallas_src>

<mosaic_0001>
module attributes {stable_mosaic.version = 11 : i64} {
  func.func @_semiotic_kernel(%arg0: i32, %arg1: memref<2x768xf32, #tpu.memory_space<vmem>>, %arg2: memref<2x8xf32, #tpu.memory_space<vmem>>, %arg3: memref<768x384xbf16, #tpu.memory_space<vmem>>, %arg4: memref<1x384xf32, #tpu.memory_space<vmem>>, %arg5: memref<8x192xf32, #tpu.memory_space<vmem>>, %arg6: memref<1x192xf32, #tpu.memory_space<vmem>>, %arg7: memref<384x384xbf16, #tpu.memory_space<vmem>>, %arg8: memref<192x384xbf16, #tpu.memory_space<vmem>>, %arg9: memref<1x384xf32, #tpu.memory_space<vmem>>, %arg10: memref<1x384xf32, #tpu.memory_space<vmem>>, %arg11: memref<1x384xf32, #tpu.memory_space<vmem>>, %arg12: memref<2x384xf32, #tpu.memory_space<vmem>>) attributes {dimension_semantics = [#tpu.dimension_semantics<parallel>], iteration_bounds = array<i64: 1>, scalar_prefetch = 0 : i64, scratch_operands = 0 : i64, tpu.core_type = #tpu.core_type<tc>, window_params = [{transform_indices = @transform_0, window_bounds = array<i64: 2, 768>}, {transform_indices = @transform_1, window_bounds = array<i64: 2, 8>}, {pipeline_mode = #tpu.pipeline_mode<synchronous>, transform_indices = @transform_2, window_bounds = array<i64: 768, 384>}, {pipeline_mode = #tpu.pipeline_mode<synchronous>, transform_indices = @transform_3, window_bounds = array<i64: 1, 384>}, {pipeline_mode = #tpu.pipeline_mode<synchronous>, transform_indices = @transform_4, window_bounds = array<i64: 8, 192>}, {pipeline_mode = #tpu.pipeline_mode<synchronous>, transform_indices = @transform_5, window_bounds = array<i64: 1, 192>}, {pipeline_mode = #tpu.pipeline_mode<synchronous>, transform_indices = @transform_6, window_bounds = array<i64: 384, 384>}, {pipeline_mode = #tpu.pipeline_mode<synchronous>, transform_indices = @transform_7, window_bounds = array<i64: 192, 384>}, {pipeline_mode = #tpu.pipeline_mode<synchronous>, transform_indices = @transform_8, window_bounds = array<i64: 1, 384>}, {pipeline_mode = #tpu.pipeline_mode<synchronous>, transform_indices = @transform_9, window_bounds = array<i64: 1, 384>}, {pipeline_mode = #tpu.pipeline_mode<synchronous>, transform_indices = @transform_10, window_bounds = array<i64: 1, 384>}, {transform_indices = @transform_11, window_bounds = array<i64: 2, 384>}]} {
    %c0 = arith.constant 0 : index
    %c0_0 = arith.constant 0 : index
    %0 = vector.load %arg1[%c0, %c0_0] : memref<2x768xf32, #tpu.memory_space<vmem>>, vector<2x768xf32>
    %1 = arith.truncf %0 : vector<2x768xf32> to vector<2x768xbf16>
    %c0_1 = arith.constant 0 : index
    %c0_2 = arith.constant 0 : index
    %2 = vector.load %arg3[%c0_1, %c0_2] : memref<768x384xbf16, #tpu.memory_space<vmem>>, vector<768x384xbf16>
    %cst = arith.constant dense<0.000000e+00> : vector<2x384xf32>
    %3 = tpu.matmul %1, %2, %cst {dimension_numbers = #tpu.dot_dimension_numbers<[1], [0], [0], [1], [0, 0, 1, 1], [], []>} : vector<2x768xbf16>, vector<768x384xbf16>, vector<2x384xf32> -> vector<2x384xf32>
    %c0_3 = arith.constant 0 : index
    %c0_4 = arith.constant 0 : index
    %4 = vector.load %arg4[%c0_3, %c0_4] : memref<1x384xf32, #tpu.memory_space<vmem>>, vector<1x384xf32>
    %5 = vector.broadcast %4 : vector<1x384xf32> to vector<2x384xf32>
    %6 = arith.addf %3, %5 : vector<2x384xf32>
    %7 = math.tanh %6 : vector<2x384xf32>
    %c0_5 = arith.constant 0 : index
    %c0_6 = arith.constant 0 : index
    %8 = vector.load %arg2[%c0_5, %c0_6] : memref<2x8xf32, #tpu.memory_space<vmem>>, vector<2x8xf32>
    %c0_7 = arith.constant 0 : index
    %c0_8 = arith.constant 0 : index
    %9 = vector.load %arg5[%c0_7, %c0_8] : memref<8x192xf32, #tpu.memory_space<vmem>>, vector<8x192xf32>
    %cst_9 = arith.constant dense<0.000000e+00> : vector<2x192xf32>
    %10 = tpu.matmul %8, %9, %cst_9 {dimension_numbers = #tpu.dot_dimension_numbers<[1], [0], [0], [1], [0, 0, 1, 1], [], []>} : vector<2x8xf32>, vector<8x192xf32>, vector<2x192xf32> -> vector<2x192xf32>
    %c0_10 = arith.constant 0 : index
    %c0_11 = arith.constant 0 : index
    %11 = vector.load %arg6[%c0_10, %c0_11] : memref<1x192xf32, #tpu.memory_space<vmem>>, vector<1x192xf32>
    %12 = vector.broadcast %11 : vector<1x192xf32> to vector<2x192xf32>
    %13 = arith.addf %10, %12 : vector<2x192xf32>
    %14 = math.tanh %13 : vector<2x192xf32>
    %15 = arith.truncf %7 : vector<2x384xf32> to vector<2x384xbf16>
    %c0_12 = arith.constant 0 : index
    %c0_13 = arith.constant 0 : index
    %16 = vector.load %arg7[%c0_12, %c0_13] : memref<384x384xbf16, #tpu.memory_space<vmem>>, vector<384x384xbf16>
    %cst_14 = arith.constant dense<0.000000e+00> : vector<2x384xf32>
    %17 = tpu.matmul %15, %16, %cst_14 {dimension_numbers = #tpu.dot_dimension_numbers<[1], [0], [0], [1], [0, 0, 1, 1], [], []>} : vector<2x384xbf16>, vector<384x384xbf16>, vector<2x384xf32> -> vector<2x384xf32>
    %18 = arith.truncf %14 : vector<2x192xf32> to vector<2x192xbf16>
    %c0_15 = arith.constant 0 : index
    %c0_16 = arith.constant 0 : index
    %19 = vector.load %arg8[%c0_15, %c0_16] : memref<192x384xbf16, #tpu.memory_space<vmem>>, vector<192x384xbf16>
    %cst_17 = arith.constant dense<0.000000e+00> : vector<2x384xf32>
    %20 = tpu.matmul %18, %19, %cst_17 {dimension_numbers = #tpu.dot_dimension_numbers<[1], [0], [0], [1], [0, 0, 1, 1], [], []>} : vector<2x192xbf16>, vector<192x384xbf16>, vector<2x384xf32> -> vector<2x384xf32>
    %21 = arith.addf %17, %20 : vector<2x384xf32>
    %c0_18 = arith.constant 0 : index
    %c0_19 = arith.constant 0 : index
    %22 = vector.load %arg9[%c0_18, %c0_19] : memref<1x384xf32, #tpu.memory_space<vmem>>, vector<1x384xf32>
    %23 = vector.broadcast %22 : vector<1x384xf32> to vector<2x384xf32>
    %24 = arith.addf %21, %23 : vector<2x384xf32>
    %cst_20 = arith.constant dense<0.000000e+00> : vector<2xf32>
    %25 = vector.multi_reduction <add>, %24, %cst_20 [1] : vector<2x384xf32> to vector<2xf32>
    %26 = vector.shape_cast %25 : vector<2xf32> to vector<2x1xf32>
    %cst_21 = arith.constant 3.840000e+02 : f32
    %27 = vector.broadcast %cst_21 : f32 to vector<2x1xf32>
    %28 = arith.divf %26, %27 : vector<2x1xf32>
    %29 = vector.broadcast %28 : vector<2x1xf32> to vector<2x384xf32>
    %30 = arith.subf %24, %29 : vector<2x384xf32>
    %31 = arith.mulf %30, %30 : vector<2x384xf32>
    %cst_22 = arith.constant dense<0.000000e+00> : vector<2xf32>
    %32 = vector.multi_reduction <add>, %31, %cst_22 [1] : vector<2x384xf32> to vector<2xf32>
    %33 = vector.shape_cast %32 : vector<2xf32> to vector<2x1xf32>
    %cst_23 = arith.constant 3.840000e+02 : f32
    %34 = vector.broadcast %cst_23 : f32 to vector<2x1xf32>
    %35 = arith.divf %33, %34 : vector<2x1xf32>
    %cst_24 = arith.constant 9.99999974E-6 : f32
    %36 = vector.broadcast %cst_24 : f32 to vector<2x1xf32>
    %37 = arith.addf %35, %36 : vector<2x1xf32>
    %38 = math.rsqrt %37 : vector<2x1xf32>
    %39 = vector.broadcast %38 : vector<2x1xf32> to vector<2x384xf32>
    %40 = arith.mulf %30, %39 : vector<2x384xf32>
    %c0_25 = arith.constant 0 : index
    %c0_26 = arith.constant 0 : index
    %41 = vector.load %arg10[%c0_25, %c0_26] : memref<1x384xf32, #tpu.memory_space<vmem>>, vector<1x384xf32>
    %42 = vector.broadcast %41 : vector<1x384xf32> to vector<2x384xf32>
    %43 = arith.mulf %40, %42 : vector<2x384xf32>
    %c0_27 = arith.constant 0 : index
    %c0_28 = arith.constant 0 : index
    %44 = vector.load %arg11[%c0_27, %c0_28] : memref<1x384xf32, #tpu.memory_space<vmem>>, vector<1x384xf32>
    %45 = vector.broadcast %44 : vector<1x384xf32> to vector<2x384xf32>
    %46 = arith.addf %43, %45 : vector<2x384xf32>
    %c0_29 = arith.constant 0 : index
    %c0_30 = arith.constant 0 : index
    %47 = vector.load %arg12[%c0_29, %c0_30] : memref<2x384xf32, #tpu.memory_space<vmem>>, vector<2x384xf32>
    tpu.vector_store %arg12[%c0_29, %c0_30], %46 {strides = array<i32>} : memref<2x384xf32, #tpu.memory_space<vmem>>, vector<2x384xf32>,
    return
  }
  func.func @transform_0(%arg0: i32) -> (i32, i32) {
    %c0_i32 = arith.constant 0 : i32
    %c0_i32_0 = arith.constant 0 : i32
    return %arg0, %c0_i32 : i32, i32
  }
  func.func @transform_1(%arg0: i32) -> (i32, i32) {
    %c0_i32 = arith.constant 0 : i32
    %c0_i32_0 = arith.constant 0 : i32
    return %arg0, %c0_i32 : i32, i32
  }
  func.func @transform_2(%arg0: i32) -> (i32, i32) {
    %c0_i32 = arith.constant 0 : i32
    %c0_i32_0 = arith.constant 0 : i32
    %c0_i32_1 = arith.constant 0 : i32
    return %c0_i32, %c0_i32_0 : i32, i32
  }
  func.func @transform_3(%arg0: i32) -> (i32, i32) {
    %c0_i32 = arith.constant 0 : i32
    %c0_i32_0 = arith.constant 0 : i32
    %c0_i32_1 = arith.constant 0 : i32
    return %c0_i32, %c0_i32_0 : i32, i32
  }
  func.func @transform_4(%arg0: i32) -> (i32, i32) {
    %c0_i32 = arith.constant 0 : i32
    %c0_i32_0 = arith.constant 0 : i32
    %c0_i32_1 = arith.constant 0 : i32
    return %c0_i32, %c0_i32_0 : i32, i32
  }
  func.func @transform_5(%arg0: i32) -> (i32, i32) {
    %c0_i32 = arith.constant 0 : i32
    %c0_i32_0 = arith.constant 0 : i32
    %c0_i32_1 = arith.constant 0 : i32
    return %c0_i32, %c0_i32_0 : i32, i32
  }
  func.func @transform_6(%arg0: i32) -> (i32, i32) {
    %c0_i32 = arith.constant 0 : i32
    %c0_i32_0 = arith.constant 0 : i32
    %c0_i32_1 = arith.constant 0 : i32
    return %c0_i32, %c0_i32_0 : i32, i32
  }
  func.func @transform_7(%arg0: i32) -> (i32, i32) {
    %c0_i32 = arith.constant 0 : i32
    %c0_i32_0 = arith.constant 0 : i32
    %c0_i32_1 = arith.constant 0 : i32
    return %c0_i32, %c0_i32_0 : i32, i32
  }
  func.func @transform_8(%arg0: i32) -> (i32, i32) {
    %c0_i32 = arith.constant 0 : i32
    %c0_i32_0 = arith.constant 0 : i32
    %c0_i32_1 = arith.constant 0 : i32
    return %c0_i32, %c0_i32_0 : i32, i32
  }
  func.func @transform_9(%arg0: i32) -> (i32, i32) {
    %c0_i32 = arith.constant 0 : i32
    %c0_i32_0 = arith.constant 0 : i32
    %c0_i32_1 = arith.constant 0 : i32
    return %c0_i32, %c0_i32_0 : i32, i32
  }
  func.func @transform_10(%arg0: i32) -> (i32, i32) {
    %c0_i32 = arith.constant 0 : i32
    %c0_i32_0 = arith.constant 0 : i32
    %c0_i32_1 = arith.constant 0 : i32
    return %c0_i32, %c0_i32_0 : i32, i32
  }
  func.func @transform_11(%arg0: i32) -> (i32, i32) {
    %c0_i32 = arith.constant 0 : i32
    %c0_i32_0 = arith.constant 0 : i32
    return %arg0, %c0_i32 : i32, i32
  }
}

</mosaic_0001>

<llo_original>
// kernel: semiotic_extractor_forward.1
$region0: #{semiotic_extractor_forward.1}
  #allocation0 [shape = 'u32[]', space=smem, size = 0x4, offset = 0x4, fixed_abs, tag = 'smem constant byte address 0x4 - core index']
  #allocation1 [shape = 'u32[144,128]{1,0:T(1,128)}', space=vmem, size = 0x12000, scoped, tag = 'internal scratch']
  %s0 = inlined_call_operand.hbm [shape: f32[2,768], index: 0, kind: input, shape index: {}]
  %s1 = inlined_call_operand.hbm [shape: f32[2,8], index: 1, kind: input, shape index: {}]
  %s2 = inlined_call_operand.hbm [shape: bf16[768,384], index: 2, kind: input, shape index: {}]
  %s3 = inlined_call_operand.hbm [shape: f32[1,384], index: 3, kind: input, shape index: {}]
  %s4 = inlined_call_operand.vmem [shape: f32[8,192], index: 4, kind: input, shape index: {}]
  %s5 = inlined_call_operand.vmem [shape: f32[1,192], index: 5, kind: input, shape index: {}]
  %s6 = inlined_call_operand.hbm [shape: bf16[384,384], index: 6, kind: input, shape index: {}]
  %s7 = inlined_call_operand.hbm [shape: bf16[192,384], index: 7, kind: input, shape index: {}]
  %s8 = inlined_call_operand.hbm [shape: f32[1,384], index: 8, kind: input, shape index: {}]
  %s9 = inlined_call_operand.hbm [shape: f32[1,384], index: 9, kind: input, shape index: {}]
  %s10 = inlined_call_operand.hbm [shape: f32[1,384], index: 10, kind: input, shape index: {}]
  %s11 = inlined_call_operand.hbm [shape: f32[2,384], index: 11, kind: output, shape index: {}]
  %s12 = sld [smem:[#allocation0]]
  $region90: #{semiotic_extractor_forward.1} parent=0
    _
  %s14 = ssub.s32 1, %s12
  %s15 = scalar_select 0, %s14, %s12
  $region1: #{semiotic_extractor_forward.1} parent=0
    #allocation2 [shape = 'u8[6144]{0}', space=vmem, size = 0x1800, scoped, tag = 'input window, operand 0, single buffered']
    #allocation3 [shape = 's32[1]{0}', space=sflag, size = 0x4, scoped, tag = 'scoped memory for semiotic_extractor_forward.1']
    #allocation4 [shape = 's32[1]{0}', space=sflag, size = 0x4, scoped, tag = 'scoped memory for semiotic_extractor_forward.1']
    #allocation5 [shape = 'u8[1024]{0}', space=vmem, size = 0x400, scoped, tag = 'input window, operand 1, single buffered']
    #allocation6 [shape = 's32[1]{0}', space=sflag, size = 0x4, scoped, tag = 'scoped memory for semiotic_extractor_forward.1']
    #allocation7 [shape = 'u8[589824]{0}', space=vmem, size = 0x90000, scoped, tag = 'input window, operand 2, single buffered']
    #allocation8 [shape = 'u8[1536]{0}', space=vmem, size = 0x800, scoped, tag = 'input window, operand 3, single buffered']
    #allocation9 [shape = 's32[1]{0}', space=sflag, size = 0x4, scoped, tag = 'scoped memory for semiotic_extractor_forward.1']
    #allocation10 [shape = 'u8[294912]{0}', space=vmem, size = 0x48000, scoped, tag = 'input window, operand 6, single buffered']
    #allocation11 [shape = 'u8[147456]{0}', space=vmem, size = 0x24000, scoped, tag = 'input window, operand 7, single buffered']
    #allocation12 [shape = 's32[1]{0}', space=sflag, size = 0x4, scoped, tag = 'scoped memory for semiotic_extractor_forward.1']
    #allocation13 [shape = 'u8[1536]{0}', space=vmem, size = 0x800, scoped, tag = 'input window, operand 8, single buffered']
    #allocation14 [shape = 'u8[1536]{0}', space=vmem, size = 0x800, scoped, tag = 'input window, operand 9, single buffered']
    #allocation15 [shape = 's32[1]{0}', space=sflag, size = 0x4, scoped, tag = 'scoped memory for semiotic_extractor_forward.1']
    #allocation16 [shape = 'u8[1536]{0}', space=vmem, size = 0x800, scoped, tag = 'input window, operand 10, single buffered']
    #allocation17 [shape = 'u8[3072]{0}', space=vmem, size = 0xc00, scoped, tag = 'output window, operand 0, single buffered']
    %16 = vsyncpa [#allocation3], 0
    %17 = vsyncpa [#allocation6], 0
    %18 = vsyncpa [#allocation9], 0
    %19 = vsyncpa [#allocation12], 0
    %20 = vsyncpa [#allocation15], 0
    %21 = vsyncpa [#allocation4], 0
    // Predicated region
    $region2: #{semiotic_extractor_forward.1} parent=1 // pred_check
      _
    $region3: #{semiotic_extractor_forward.1} parent=1 // pred_check_branch
      %23 = sbr.rel (0) target = $region5
    $region4: #{semiotic_extractor_forward.1} parent=1 // pred_region
      %s25 = ssub.s32 192, 192
      %26 = vsyncadd [#allocation3], %s25
      %s28 = sshll.u32 [#allocation2], 4
      %s29 = int_to_ptr.vmem [resolvable:$true] %s28
      %31 = dma.hbm_to_vmem [thread:$0]  %s0, 192, %s29, [#allocation3]
    $region5: #{semiotic_extractor_forward.1} parent=1 // pred_fallthru
      _
    // Predicated region
    $region6: #{semiotic_extractor_forward.1} parent=1 // pred_check
      _
    $region7: #{semiotic_extractor_forward.1} parent=1 // pred_check_branch
      %33 = sbr.rel (0) target = $region9
    $region8: #{semiotic_extractor_forward.1} parent=1 // pred_region
      %s35 = ssub.s32 32, 32
      %36 = vsyncadd [#allocation6], %s35
      %s38 = sshll.u32 [#allocation5], 4
      %s39 = int_to_ptr.vmem [resolvable:$true] %s38
      %41 = dma.hbm_to_vmem [thread:$0]  %s1, 32, %s39, [#allocation6]
    $region9: #{semiotic_extractor_forward.1} parent=1 // pred_fallthru
      _
    // Predicated region
    $region10: #{semiotic_extractor_forward.1} parent=1 // pred_check
      _
    $region11: #{semiotic_extractor_forward.1} parent=1 // pred_check_branch
      %43 = sbr.rel (0) target = $region13
    $region12: #{semiotic_extractor_forward.1} parent=1 // pred_region
      %s45 = ssub.s32 18432, 18432
      %46 = vsyncadd [#allocation6], %s45
      %s47 = sshll.u32 [#allocation7], 4
      %s48 = int_to_ptr.vmem [resolvable:$true] %s47
      %53 = dma.hbm_to_vmem [thread:$0]  %s2, 18432, %s48, [#allocation6], 192, 192, 12
    $region13: #{semiotic_extractor_forward.1} parent=1 // pred_fallthru
      _
    // Predicated region
    $region14: #{semiotic_extractor_forward.1} parent=1 // pred_check
      _
    $region15: #{semiotic_extractor_forward.1} parent=1 // pred_check_branch
      %55 = sbr.rel (0) target = $region17
    $region16: #{semiotic_extractor_forward.1} parent=1 // pred_region
      %s57 = ssub.s32 48, 48
      %58 = vsyncadd [#allocation9], %s57
      %s60 = sshll.u32 [#allocation8], 4
      %s61 = int_to_ptr.vmem [resolvable:$true] %s60
      %63 = dma.hbm_to_vmem [thread:$0]  %s3, 48, %s61, [#allocation9]
    $region17: #{semiotic_extractor_forward.1} parent=1 // pred_fallthru
      _
    // Predicated region
    $region18: #{semiotic_extractor_forward.1} parent=1 // pred_check
      _
    $region19: #{semiotic_extractor_forward.1} parent=1 // pred_check_branch
      %65 = sbr.rel (0) target = $region21
    $region20: #{semiotic_extractor_forward.1} parent=1 // pred_region
      _
    $region21: #{semiotic_extractor_forward.1} parent=1 // pred_fallthru
      _
    // Predicated region
    $region22: #{semiotic_extractor_forward.1} parent=1 // pred_check
      _
    $region23: #{semiotic_extractor_forward.1} parent=1 // pred_check_branch
      %67 = sbr.rel (0) target = $region25
    $region24: #{semiotic_extractor_forward.1} parent=1 // pred_region
      _
    $region25: #{semiotic_extractor_forward.1} parent=1 // pred_fallthru
      _
    // Predicated region
    $region26: #{semiotic_extractor_forward.1} parent=1 // pred_check
      _
    $region27: #{semiotic_extractor_forward.1} parent=1 // pred_check_branch
      %69 = sbr.rel (0) target = $region29
    $region28: #{semiotic_extractor_forward.1} parent=1 // pred_region
      %s71 = ssub.s32 9216, 9216
      %72 = vsyncadd [#allocation9], %s71
      %s73 = sshll.u32 [#allocation10], 4
      %s74 = int_to_ptr.vmem [resolvable:$true] %s73
      %79 = dma.hbm_to_vmem [thread:$0]  %s6, 9216, %s74, [#allocation9], 192, 192, 12
    $region29: #{semiotic_extractor_forward.1} parent=1 // pred_fallthru
      _
    // Predicated region
    $region30: #{semiotic_extractor_forward.1} parent=1 // pred_check
      _
    $region31: #{semiotic_extractor_forward.1} parent=1 // pred_check_branch
      %81 = sbr.rel (0) target = $region33
    $region32: #{semiotic_extractor_forward.1} parent=1 // pred_region
      %s83 = ssub.s32 4608, 4608
      %84 = vsyncadd [#allocation12], %s83
      %s85 = sshll.u32 [#allocation11], 4
      %s86 = int_to_ptr.vmem [resolvable:$true] %s85
      %91 = dma.hbm_to_vmem [thread:$0]  %s7, 4608, %s86, [#allocation12], 192, 192, 12
    $region33: #{semiotic_extractor_forward.1} parent=1 // pred_fallthru
      _
    // Predicated region
    $region34: #{semiotic_extractor_forward.1} parent=1 // pred_check
      _
    $region35: #{semiotic_extractor_forward.1} parent=1 // pred_check_branch
      %93 = sbr.rel (0) target = $region37
    $region36: #{semiotic_extractor_forward.1} parent=1 // pred_region
      %s95 = ssub.s32 48, 48
      %96 = vsyncadd [#allocation12], %s95
      %s98 = sshll.u32 [#allocation13], 4
      %s99 = int_to_ptr.vmem [resolvable:$true] %s98
      %101 = dma.hbm_to_vmem [thread:$0]  %s8, 48, %s99, [#allocation12]
    $region37: #{semiotic_extractor_forward.1} parent=1 // pred_fallthru
      _
    // Predicated region
    $region38: #{semiotic_extractor_forward.1} parent=1 // pred_check
      _
    $region39: #{semiotic_extractor_forward.1} parent=1 // pred_check_branch
      %103 = sbr.rel (0) target = $region41
    $region40: #{semiotic_extractor_forward.1} parent=1 // pred_region
      %s105 = ssub.s32 48, 48
      %106 = vsyncadd [#allocation15], %s105
      %s108 = sshll.u32 [#allocation14], 4
      %s109 = int_to_ptr.vmem [resolvable:$true] %s108
      %111 = dma.hbm_to_vmem [thread:$0]  %s9, 48, %s109, [#allocation15]
    $region41: #{semiotic_extractor_forward.1} parent=1 // pred_fallthru
      _
    // Predicated region
    $region42: #{semiotic_extractor_forward.1} parent=1 // pred_check
      _
    $region43: #{semiotic_extractor_forward.1} parent=1 // pred_check_branch
      %113 = sbr.rel (0) target = $region45
    $region44: #{semiotic_extractor_forward.1} parent=1 // pred_region
      %s115 = ssub.s32 48, 48
      %116 = vsyncadd [#allocation15], %s115
      %s118 = sshll.u32 [#allocation16], 4
      %s119 = int_to_ptr.vmem [resolvable:$true] %s118
      %121 = dma.hbm_to_vmem [thread:$0]  %s10, 48, %s119, [#allocation15]
    $region45: #{semiotic_extractor_forward.1} parent=1 // pred_fallthru
      _
    // Predicated region
    $region46: #{semiotic_extractor_forward.1} parent=1 // pred_check
      _
    $region47: #{semiotic_extractor_forward.1} parent=1 // pred_check_branch
      %123 = sbr.rel (0) target = $region49
    $region48: #{semiotic_extractor_forward.1} parent=1 // pred_region
      %124 = dma.done [#allocation3], 192
    $region49: #{semiotic_extractor_forward.1} parent=1 // pred_fallthru
      _
    // Predicated region
    $region50: #{semiotic_extractor_forward.1} parent=1 // pred_check
      _
    $region51: #{semiotic_extractor_forward.1} parent=1 // pred_check_branch
      %126 = sbr.rel (0) target = $region53
    $region52: #{semiotic_extractor_forward.1} parent=1 // pred_region
      %127 = dma.done [#allocation6], 32
    $region53: #{semiotic_extractor_forward.1} parent=1 // pred_fallthru
      _
    // Predicated region
    $region54: #{semiotic_extractor_forward.1} parent=1 // pred_check
      _
    $region55: #{semiotic_extractor_forward.1} parent=1 // pred_check_branch
      %129 = sbr.rel (0) target = $region57
    $region56: #{semiotic_extractor_forward.1} parent=1 // pred_region
      %130 = dma.done [#allocation6], 18432
    $region57: #{semiotic_extractor_forward.1} parent=1 // pred_fallthru
      _
    // Predicated region
    $region58: #{semiotic_extractor_forward.1} parent=1 // pred_check
      _
    $region59: #{semiotic_extractor_forward.1} parent=1 // pred_check_branch
      %132 = sbr.rel (0) target = $region61
    $region60: #{semiotic_extractor_forward.1} parent=1 // pred_region
      %133 = dma.done [#allocation9], 48
    $region61: #{semiotic_extractor_forward.1} parent=1 // pred_fallthru
      _
    // Predicated region
    $region62: #{semiotic_extractor_forward.1} parent=1 // pred_check
      _
    $region63: #{semiotic_extractor_forward.1} parent=1 // pred_check_branch
      %135 = sbr.rel (0) target = $region65
    $region64: #{semiotic_extractor_forward.1} parent=1 // pred_region
      %136 = dma.done [#allocation9], 9216
    $region65: #{semiotic_extractor_forward.1} parent=1 // pred_fallthru
      _
    // Predicated region
    $region66: #{semiotic_extractor_forward.1} parent=1 // pred_check
      _
    $region67: #{semiotic_extractor_forward.1} parent=1 // pred_check_branch
      %138 = sbr.rel (0) target = $region69
    $region68: #{semiotic_extractor_forward.1} parent=1 // pred_region
      %139 = dma.done [#allocation12], 4608
    $region69: #{semiotic_extractor_forward.1} parent=1 // pred_fallthru
      _
    // Predicated region
    $region70: #{semiotic_extractor_forward.1} parent=1 // pred_check
      _
    $region71: #{semiotic_extractor_forward.1} parent=1 // pred_check_branch
      %141 = sbr.rel (0) target = $region73
    $region72: #{semiotic_extractor_forward.1} parent=1 // pred_region
      %142 = dma.done [#allocation12], 48
    $region73: #{semiotic_extractor_forward.1} parent=1 // pred_fallthru
      _
    // Predicated region
    $region74: #{semiotic_extractor_forward.1} parent=1 // pred_check
      _
    $region75: #{semiotic_extractor_forward.1} parent=1 // pred_check_branch
      %144 = sbr.rel (0) target = $region77
    $region76: #{semiotic_extractor_forward.1} parent=1 // pred_region
      %145 = dma.done [#allocation15], 48
    $region77: #{semiotic_extractor_forward.1} parent=1 // pred_fallthru
      _
    // Predicated region
    $region78: #{semiotic_extractor_forward.1} parent=1 // pred_check
      _
    $region79: #{semiotic_extractor_forward.1} parent=1 // pred_check_branch
      %147 = sbr.rel (0) target = $region81
    $region80: #{semiotic_extractor_forward.1} parent=1 // pred_region
      %148 = dma.done [#allocation15], 48
    $region81: #{semiotic_extractor_forward.1} parent=1 // pred_fallthru
      _
    %v150 = vld [vmem:[#allocation2] sm:$0xff]
    %v151 = vld [vmem:[#allocation2 + $0x8] sm:$0xf]
    %v154 = vcombine.high %v150, %v150
    %v156 = vunpack.c.l.s4 1983009808
    %v157 = vunpack.c.0.s8 %v156
    %v158 = vlaneseq
    %v159 = vshrl.u32 %v158, 7
    %v160 = vsub.s32 %v157, %v159
    %v161 = vrot.slane %v150, %v160
    %v163 = vunpack.c.l.s4 1983009808
    %v164 = vunpack.c.0.s8 %v163
    %v165 = vlaneseq
    %v166 = vshrl.u32 %v165, 7
    %v167 = vsub.s32 %v164, %v166
    %v168 = vrot.slane %v154, %v167
    %v169 = vcombine.high %v161, %v161
    %v170 = vcombine.high %v168, %v168
    %v172 = vunpack.c.l.s4 1983009808
    %v173 = vunpack.c.0.s8 %v172
    %v174 = vlaneseq
    %v175 = vshrl.u32 %v174, 7
    %v176 = vsub.s32 %v173, %v175
    %v177 = vrot.slane %v151, %v176
    %v178 = vcombine.high %v177, %v177
    %v185 = vpack.c.bf16 %v161, %v161
    %v186 = vpack.c.bf16 %v169, %v169
    %v187 = vpack.c.bf16 %v168, %v168
    %v188 = vpack.c.bf16 %v170, %v170
    %v189 = vpack.c.bf16 %v177, %v177
    %v190 = vpack.c.bf16 %v178, %v178
    %v191 = vld [vmem:[#allocation7] sm:$0xff]
    %v192 = vld [vmem:[#allocation7 + $0x8] sm:$0xf]
    %v193 = vld [vmem:[#allocation7 + $0xc] sm:$0xff]
    %v194 = vld [vmem:[#allocation7 + $0x14] sm:$0xf]
    %v195 = vld [vmem:[#allocation7 + $0x18] sm:$0xff]
    %v196 = vld [vmem:[#allocation7 + $0x20] sm:$0xf]
    %v197 = vld [vmem:[#allocation7 + $0x24] sm:$0xff]
    %v198 = vld [vmem:[#allocation7 + $0x2c] sm:$0xf]
    %v199 = vld [vmem:[#allocation7 + $0x30] sm:$0xff]
    %v200 = vld [vmem:[#allocation7 + $0x38] sm:$0xf]
    %v201 = vld [vmem:[#allocation7 + $0x3c] sm:$0xff]
    %v202 = vld [vmem:[#allocation7 + $0x44] sm:$0xf]
    %v203 = vld [vmem:[#allocation7 + $0x48] sm:$0xff]
    %v204 = vld [vmem:[#allocation7 + $0x50] sm:$0xf]
    %v205 = vld [vmem:[#allocation7 + $0x54] sm:$0xff]
    %v206 = vld [vmem:[#allocation7 + $0x5c] sm:$0xf]
    %v207 = vld [vmem:[#allocation7 + $0x60] sm:$0xff]
    %v208 = vld [vmem:[#allocation7 + $0x68] sm:$0xf]
    %v209 = vld [vmem:[#allocation7 + $0x6c] sm:$0xff]
    %v210 = vld [vmem:[#allocation7 + $0x74] sm:$0xf]
    %v211 = vld [vmem:[#allocation7 + $0x78] sm:$0xff]
    %v212 = vld [vmem:[#allocation7 + $0x80] sm:$0xf]
    %v213 = vld [vmem:[#allocation7 + $0x84] sm:$0xff]
    %v214 = vld [vmem:[#allocation7 + $0x8c] sm:$0xf]
    %v215 = vld [vmem:[#allocation7 + $0x90] sm:$0xff]
    %v216 = vld [vmem:[#allocation7 + $0x98] sm:$0xf]
    %v217 = vld [vmem:[#allocation7 + $0x9c] sm:$0xff]
    %v218 = vld [vmem:[#allocation7 + $0xa4] sm:$0xf]
    %v219 = vld [vmem:[#allocation7 + $0xa8] sm:$0xff]
    %v220 = vld [vmem:[#allocation7 + $0xb0] sm:$0xf]
    %v221 = vld [vmem:[#allocation7 + $0xb4] sm:$0xff]
    %v222 = vld [vmem:[#allocation7 + $0xbc] sm:$0xf]
    %v223 = vld [vmem:[#allocation7 + $0xc0] sm:$0xff]
    %v224 = vld [vmem:[#allocation7 + $0xc8] sm:$0xf]
    %v225 = vld [vmem:[#allocation7 + $0xcc] sm:$0xff]
    %v226 = vld [vmem:[#allocation7 + $0xd4] sm:$0xf]
    %v227 = vld [vmem:[#allocation7 + $0xd8] sm:$0xff]
    %v228 = vld [vmem:[#allocation7 + $0xe0] sm:$0xf]
    %v229 = vld [vmem:[#allocation7 + $0xe4] sm:$0xff]
    %v230 = vld [vmem:[#allocation7 + $0xec] sm:$0xf]
    %v231 = vld [vmem:[#allocation7 + $0xf0] sm:$0xff]
    %v232 = vld [vmem:[#allocation7 + $0xf8] sm:$0xf]
    %v233 = vld [vmem:[#allocation7 + $0xfc] sm:$0xff]
    %v234 = vld [vmem:[#allocation7 + $0x104] sm:$0xf]
    %v235 = vld [vmem:[#allocation7 + $0x108] sm:$0xff]
    %v236 = vld [vmem:[#allocation7 + $0x110] sm:$0xf]
    %v237 = vld [vmem:[#allocation7 + $0x114] sm:$0xff]
    %v238 = vld [vmem:[#allocation7 + $0x11c] sm:$0xf]
    %v239 = vld [vmem:[#allocation7 + $0x120] sm:$0xff]
    %v240 = vld [vmem:[#allocation7 + $0x128] sm:$0xf]
    %v241 = vld [vmem:[#allocation7 + $0x12c] sm:$0xff]
    %v242 = vld [vmem:[#allocation7 + $0x134] sm:$0xf]
    %v243 = vld [vmem:[#allocation7 + $0x138] sm:$0xff]
    %v244 = vld [vmem:[#allocation7 + $0x140] sm:$0xf]
    %v245 = vld [vmem:[#allocation7 + $0x144] sm:$0xff]
    %v246 = vld [vmem:[#allocation7 + $0x14c] sm:$0xf]
    %v247 = vld [vmem:[#allocation7 + $0x150] sm:$0xff]
    %v248 = vld [vmem:[#allocation7 + $0x158] sm:$0xf]
    %v249 = vld [vmem:[#allocation7 + $0x15c] sm:$0xff]
    %v250 = vld [vmem:[#allocation7 + $0x164] sm:$0xf]
    %v251 = vld [vmem:[#allocation7 + $0x168] sm:$0xff]
    %v252 = vld [vmem:[#allocation7 + $0x170] sm:$0xf]
    %v253 = vld [vmem:[#allocation7 + $0x174] sm:$0xff]
    %v254 = vld [vmem:[#allocation7 + $0x17c] sm:$0xf]
    %v255 = vld [vmem:[#allocation7 + $0x180] sm:$0xff]
    %v256 = vld [vmem:[#allocation7 + $0x188] sm:$0xf]
    %v257 = vld [vmem:[#allocation7 + $0x18c] sm:$0xff]
    %v258 = vld [vmem:[#allocation7 + $0x194] sm:$0xf]
    %v259 = vld [vmem:[#allocation7 + $0x198] sm:$0xff]
    %v260 = vld [vmem:[#allocation7 + $0x1a0] sm:$0xf]
    %v261 = vld [vmem:[#allocation7 + $0x1a4] sm:$0xff]
    %v262 = vld [vmem:[#allocation7 + $0x1ac] sm:$0xf]
    %v263 = vld [vmem:[#allocation7 + $0x1b0] sm:$0xff]
    %v264 = vld [vmem:[#allocation7 + $0x1b8] sm:$0xf]
    %v265 = vld [vmem:[#allocation7 + $0x1bc] sm:$0xff]
    %v266 = vld [vmem:[#allocation7 + $0x1c4] sm:$0xf]
    %v267 = vld [vmem:[#allocation7 + $0x1c8] sm:$0xff]
    %v268 = vld [vmem:[#allocation7 + $0x1d0] sm:$0xf]
    %v269 = vld [vmem:[#allocation7 + $0x1d4] sm:$0xff]
    %v270 = vld [vmem:[#allocation7 + $0x1dc] sm:$0xf]
    %v271 = vld [vmem:[#allocation7 + $0x1e0] sm:$0xff]
    %v272 = vld [vmem:[#allocation7 + $0x1e8] sm:$0xf]
    %v273 = vld [vmem:[#allocation7 + $0x1ec] sm:$0xff]
    %v274 = vld [vmem:[#allocation7 + $0x1f4] sm:$0xf]
    %v275 = vld [vmem:[#allocation7 + $0x1f8] sm:$0xff]
    %v276 = vld [vmem:[#allocation7 + $0x200] sm:$0xf]
    %v277 = vld [vmem:[#allocation7 + $0x204] sm:$0xff]
    %v278 = vld [vmem:[#allocation7 + $0x20c] sm:$0xf]
    %v279 = vld [vmem:[#allocation7 + $0x210] sm:$0xff]
    %v280 = vld [vmem:[#allocation7 + $0x218] sm:$0xf]
    %v281 = vld [vmem:[#allocation7 + $0x21c] sm:$0xff]
    %v282 = vld [vmem:[#allocation7 + $0x224] sm:$0xf]
    %v283 = vld [vmem:[#allocation7 + $0x228] sm:$0xff]
    %v284 = vld [vmem:[#allocation7 + $0x230] sm:$0xf]
    %v285 = vld [vmem:[#allocation7 + $0x234] sm:$0xff]
    %v286 = vld [vmem:[#allocation7 + $0x23c] sm:$0xf]
    %v287 = vld [vmem:[#allocation7 + $0x240] sm:$0xff]
    %v288 = vld [vmem:[#allocation7 + $0x248] sm:$0xf]
    %v289 = vld [vmem:[#allocation7 + $0x24c] sm:$0xff]
    %v290 = vld [vmem:[#allocation7 + $0x254] sm:$0xf]
    %v291 = vld [vmem:[#allocation7 + $0x258] sm:$0xff]
    %v292 = vld [vmem:[#allocation7 + $0x260] sm:$0xf]
    %v293 = vld [vmem:[#allocation7 + $0x264] sm:$0xff]
    %v294 = vld [vmem:[#allocation7 + $0x26c] sm:$0xf]
    %v295 = vld [vmem:[#allocation7 + $0x270] sm:$0xff]
    %v296 = vld [vmem:[#allocation7 + $0x278] sm:$0xf]
    %v297 = vld [vmem:[#allocation7 + $0x27c] sm:$0xff]
    %v298 = vld [vmem:[#allocation7 + $0x284] sm:$0xf]
    %v299 = vld [vmem:[#allocation7 + $0x288] sm:$0xff]
    %v300 = vld [vmem:[#allocation7 + $0x290] sm:$0xf]
    %v301 = vld [vmem:[#allocation7 + $0x294] sm:$0xff]
    %v302 = vld [vmem:[#allocation7 + $0x29c] sm:$0xf]
    %v303 = vld [vmem:[#allocation7 + $0x2a0] sm:$0xff]
    %v304 = vld [vmem:[#allocation7 + $0x2a8] sm:$0xf]
    %v305 = vld [vmem:[#allocation7 + $0x2ac] sm:$0xff]
    %v306 = vld [vmem:[#allocation7 + $0x2b4] sm:$0xf]
    %v307 = vld [vmem:[#allocation7 + $0x2b8] sm:$0xff]
    %v308 = vld [vmem:[#allocation7 + $0x2c0] sm:$0xf]
    %v309 = vld [vmem:[#allocation7 + $0x2c4] sm:$0xff]
    %v310 = vld [vmem:[#allocation7 + $0x2cc] sm:$0xf]
    %v311 = vld [vmem:[#allocation7 + $0x2d0] sm:$0xff]
    %v312 = vld [vmem:[#allocation7 + $0x2d8] sm:$0xf]
    %v313 = vld [vmem:[#allocation7 + $0x2dc] sm:$0xff]
    %v314 = vld [vmem:[#allocation7 + $0x2e4] sm:$0xf]
    %v315 = vld [vmem:[#allocation7 + $0x2e8] sm:$0xff]
    %v316 = vld [vmem:[#allocation7 + $0x2f0] sm:$0xf]
    %v317 = vld [vmem:[#allocation7 + $0x2f4] sm:$0xff]
    %v318 = vld [vmem:[#allocation7 + $0x2fc] sm:$0xf]
    %v319 = vld [vmem:[#allocation7 + $0x300] sm:$0xff]
    %v320 = vld [vmem:[#allocation7 + $0x308] sm:$0xf]
    %v321 = vld [vmem:[#allocation7 + $0x30c] sm:$0xff]
    %v322 = vld [vmem:[#allocation7 + $0x314] sm:$0xf]
    %v323 = vld [vmem:[#allocation7 + $0x318] sm:$0xff]
    %v324 = vld [vmem:[#allocation7 + $0x320] sm:$0xf]
    %v325 = vld [vmem:[#allocation7 + $0x324] sm:$0xff]
    %v326 = vld [vmem:[#allocation7 + $0x32c] sm:$0xf]
    %v327 = vld [vmem:[#allocation7 + $0x330] sm:$0xff]
    %v328 = vld [vmem:[#allocation7 + $0x338] sm:$0xf]
    %v329 = vld [vmem:[#allocation7 + $0x33c] sm:$0xff]
    %v330 = vld [vmem:[#allocation7 + $0x344] sm:$0xf]
    %v331 = vld [vmem:[#allocation7 + $0x348] sm:$0xff]
    %v332 = vld [vmem:[#allocation7 + $0x350] sm:$0xf]
    %v333 = vld [vmem:[#allocation7 + $0x354] sm:$0xff]
    %v334 = vld [vmem:[#allocation7 + $0x35c] sm:$0xf]
    %v335 = vld [vmem:[#allocation7 + $0x360] sm:$0xff]
    %v336 = vld [vmem:[#allocation7 + $0x368] sm:$0xf]
    %v337 = vld [vmem:[#allocation7 + $0x36c] sm:$0xff]
    %v338 = vld [vmem:[#allocation7 + $0x374] sm:$0xf]
    %v339 = vld [vmem:[#allocation7 + $0x378] sm:$0xff]
    %v340 = vld [vmem:[#allocation7 + $0x380] sm:$0xf]
    %v341 = vld [vmem:[#allocation7 + $0x384] sm:$0xff]
    %v342 = vld [vmem:[#allocation7 + $0x38c] sm:$0xf]
    %v343 = vld [vmem:[#allocation7 + $0x390] sm:$0xff]
    %v344 = vld [vmem:[#allocation7 + $0x398] sm:$0xf]
    %v345 = vld [vmem:[#allocation7 + $0x39c] sm:$0xff]
    %v346 = vld [vmem:[#allocation7 + $0x3a4] sm:$0xf]
    %v347 = vld [vmem:[#allocation7 + $0x3a8] sm:$0xff]
    %v348 = vld [vmem:[#allocation7 + $0x3b0] sm:$0xf]
    %v349 = vld [vmem:[#allocation7 + $0x3b4] sm:$0xff]
    %v350 = vld [vmem:[#allocation7 + $0x3bc] sm:$0xf]
    %v351 = vld [vmem:[#allocation7 + $0x3c0] sm:$0xff]
    %v352 = vld [vmem:[#allocation7 + $0x3c8] sm:$0xf]
    %v353 = vld [vmem:[#allocation7 + $0x3cc] sm:$0xff]
    %v354 = vld [vmem:[#allocation7 + $0x3d4] sm:$0xf]
    %v355 = vld [vmem:[#allocation7 + $0x3d8] sm:$0xff]
    %v356 = vld [vmem:[#allocation7 + $0x3e0] sm:$0xf]
    %v357 = vld [vmem:[#allocation7 + $0x3e4] sm:$0xff]
    %v358 = vld [vmem:[#allocation7 + $0x3ec] sm:$0xf]
    %v359 = vld [vmem:[#allocation7 + $0x3f0] sm:$0xff]
    %v360 = vld [vmem:[#allocation7 + $0x3f8] sm:$0xf]
    %v361 = vld [vmem:[#allocation7 + $0x3fc] sm:$0xff]
    %v362 = vld [vmem:[#allocation7 + $0x404] sm:$0xf]
    %v363 = vld [vmem:[#allocation7 + $0x408] sm:$0xff]
    %v364 = vld [vmem:[#allocation7 + $0x410] sm:$0xf]
    %v365 = vld [vmem:[#allocation7 + $0x414] sm:$0xff]
    %v366 = vld [vmem:[#allocation7 + $0x41c] sm:$0xf]
    %v367 = vld [vmem:[#allocation7 + $0x420] sm:$0xff]
    %v368 = vld [vmem:[#allocation7 + $0x428] sm:$0xf]
    %v369 = vld [vmem:[#allocation7 + $0x42c] sm:$0xff]
    %v370 = vld [vmem:[#allocation7 + $0x434] sm:$0xf]
    %v371 = vld [vmem:[#allocation7 + $0x438] sm:$0xff]
    %v372 = vld [vmem:[#allocation7 + $0x440] sm:$0xf]
    %v373 = vld [vmem:[#allocation7 + $0x444] sm:$0xff]
    %v374 = vld [vmem:[#allocation7 + $0x44c] sm:$0xf]
    %v375 = vld [vmem:[#allocation7 + $0x450] sm:$0xff]
    %v376 = vld [vmem:[#allocation7 + $0x458] sm:$0xf]
    %v377 = vld [vmem:[#allocation7 + $0x45c] sm:$0xff]
    %v378 = vld [vmem:[#allocation7 + $0x464] sm:$0xf]
    %v379 = vld [vmem:[#allocation7 + $0x468] sm:$0xff]
    %v380 = vld [vmem:[#allocation7 + $0x470] sm:$0xf]
    %v381 = vld [vmem:[#allocation7 + $0x474] sm:$0xff]
    %v382 = vld [vmem:[#allocation7 + $0x47c] sm:$0xf]
    %v383 = vld [vmem:[#allocation8] sm:$0x7]
    %v385 = vlaneseq
    %v386 = vshrl.u32 %v385, 7
    %v387 = vsub.s32 0, %v386
    %v388 = vrot.slane %v383, %v387
    %v389 = vlaneseq
    %v390 = vshrl.u32 %v389, 7
    %v391 = vsub.s32 1, %v390
    %v392 = vrot.slane %v383, %v391
    %v393 = vlaneseq
    %v394 = vshrl.u32 %v393, 7
    %v395 = vsub.s32 2, %v394
    %v396 = vrot.slane %v383, %v395
    %v592 = vunpack.c.l.b16 %v191
    %v593 = vunpack.c.h.b16 %v191
    %v594 = vunpack.c.l.b16 %v192
    %v595 = vunpack.c.l.b16 %v193
    %v596 = vunpack.c.h.b16 %v193
    %v597 = vunpack.c.l.b16 %v194
    %v598 = vunpack.c.l.b16 %v195
    %v599 = vunpack.c.h.b16 %v195
    %v600 = vunpack.c.l.b16 %v196
    %v601 = vunpack.c.l.b16 %v197
    %v602 = vunpack.c.h.b16 %v197
    %v603 = vunpack.c.l.b16 %v198
    %v604 = vunpack.c.l.b16 %v199
    %v605 = vunpack.c.h.b16 %v199
    %v606 = vunpack.c.l.b16 %v200
    %v607 = vunpack.c.l.b16 %v201
    %v608 = vunpack.c.h.b16 %v201
    %v609 = vunpack.c.l.b16 %v202
    %v610 = vunpack.c.l.b16 %v203
    %v611 = vunpack.c.h.b16 %v203
    %v612 = vunpack.c.l.b16 %v204
    %v613 = vunpack.c.l.b16 %v205
    %v614 = vunpack.c.h.b16 %v205
    %v615 = vunpack.c.l.b16 %v206
    %v616 = vunpack.c.l.b16 %v207
    %v617 = vunpack.c.h.b16 %v207
    %v618 = vunpack.c.l.b16 %v208
    %v619 = vunpack.c.l.b16 %v209
    %v620 = vunpack.c.h.b16 %v209
    %v621 = vunpack.c.l.b16 %v210
    %v622 = vunpack.c.l.b16 %v211
    %v623 = vunpack.c.h.b16 %v211
    %v624 = vunpack.c.l.b16 %v212
    %v625 = vunpack.c.l.b16 %v213
    %v626 = vunpack.c.h.b16 %v213
    %v627 = vunpack.c.l.b16 %v214
    %v628 = vunpack.c.l.b16 %v215
    %v629 = vunpack.c.h.b16 %v215
    %v630 = vunpack.c.l.b16 %v216
    %v631 = vunpack.c.l.b16 %v217
    %v632 = vunpack.c.h.b16 %v217
    %v633 = vunpack.c.l.b16 %v218
    %v634 = vunpack.c.l.b16 %v219
    %v635 = vunpack.c.h.b16 %v219
    %v636 = vunpack.c.l.b16 %v220
    %v637 = vunpack.c.l.b16 %v221
    %v638 = vunpack.c.h.b16 %v221
    %v639 = vunpack.c.l.b16 %v222
    %v640 = vunpack.c.l.b16 %v223
    %v641 = vunpack.c.h.b16 %v223
    %v642 = vunpack.c.l.b16 %v224
    %v643 = vunpack.c.l.b16 %v225
    %v644 = vunpack.c.h.b16 %v225
    %v645 = vunpack.c.l.b16 %v226
    %v646 = vunpack.c.l.b16 %v227
    %v647 = vunpack.c.h.b16 %v227
    %v648 = vunpack.c.l.b16 %v228
    %v649 = vunpack.c.l.b16 %v229
    %v650 = vunpack.c.h.b16 %v229
    %v651 = vunpack.c.l.b16 %v230
    %v652 = vunpack.c.l.b16 %v231
    %v653 = vunpack.c.h.b16 %v231
    %v654 = vunpack.c.l.b16 %v232
    %v655 = vunpack.c.l.b16 %v233
    %v656 = vunpack.c.h.b16 %v233
    %v657 = vunpack.c.l.b16 %v234
    %v658 = vunpack.c.l.b16 %v235
    %v659 = vunpack.c.h.b16 %v235
    %v660 = vunpack.c.l.b16 %v236
    %v661 = vunpack.c.l.b16 %v237
    %v662 = vunpack.c.h.b16 %v237
    %v663 = vunpack.c.l.b16 %v238
    %v664 = vunpack.c.l.b16 %v239
    %v665 = vunpack.c.h.b16 %v239
    %v666 = vunpack.c.l.b16 %v240
    %v667 = vunpack.c.l.b16 %v241
    %v668 = vunpack.c.h.b16 %v241
    %v669 = vunpack.c.l.b16 %v242
    %v670 = vunpack.c.l.b16 %v243
    %v671 = vunpack.c.h.b16 %v243
    %v672 = vunpack.c.l.b16 %v244
    %v673 = vunpack.c.l.b16 %v245
    %v674 = vunpack.c.h.b16 %v245
    %v675 = vunpack.c.l.b16 %v246
    %v676 = vunpack.c.l.b16 %v247
    %v677 = vunpack.c.h.b16 %v247
    %v678 = vunpack.c.l.b16 %v248
    %v679 = vunpack.c.l.b16 %v249
    %v680 = vunpack.c.h.b16 %v249
    %v681 = vunpack.c.l.b16 %v250
    %v682 = vunpack.c.l.b16 %v251
    %v683 = vunpack.c.h.b16 %v251
    %v684 = vunpack.c.l.b16 %v252
    %v685 = vunpack.c.l.b16 %v253
    %v686 = vunpack.c.h.b16 %v253
    %v687 = vunpack.c.l.b16 %v254
    %v688 = vunpack.c.l.b16 %v255
    %v689 = vunpack.c.h.b16 %v255
    %v690 = vunpack.c.l.b16 %v256
    %v691 = vunpack.c.l.b16 %v257
    %v692 = vunpack.c.h.b16 %v257
    %v693 = vunpack.c.l.b16 %v258
    %v694 = vunpack.c.l.b16 %v259
    %v695 = vunpack.c.h.b16 %v259
    %v696 = vunpack.c.l.b16 %v260
    %v697 = vunpack.c.l.b16 %v261
    %v698 = vunpack.c.h.b16 %v261
    %v699 = vunpack.c.l.b16 %v262
    %v700 = vunpack.c.l.b16 %v263
    %v701 = vunpack.c.h.b16 %v263
    %v702 = vunpack.c.l.b16 %v264
    %v703 = vunpack.c.l.b16 %v265
    %v704 = vunpack.c.h.b16 %v265
    %v705 = vunpack.c.l.b16 %v266
    %v706 = vunpack.c.l.b16 %v267
    %v707 = vunpack.c.h.b16 %v267
    %v708 = vunpack.c.l.b16 %v268
    %v709 = vunpack.c.l.b16 %v269
    %v710 = vunpack.c.h.b16 %v269
    %v711 = vunpack.c.l.b16 %v270
    %v712 = vunpack.c.l.b16 %v271
    %v713 = vunpack.c.h.b16 %v271
    %v714 = vunpack.c.l.b16 %v272
    %v715 = vunpack.c.l.b16 %v273
    %v716 = vunpack.c.h.b16 %v273
    %v717 = vunpack.c.l.b16 %v274
    %v718 = vunpack.c.l.b16 %v275
    %v719 = vunpack.c.h.b16 %v275
    %v720 = vunpack.c.l.b16 %v276
    %v721 = vunpack.c.l.b16 %v277
    %v722 = vunpack.c.h.b16 %v277
    %v723 = vunpack.c.l.b16 %v278
    %v724 = vunpack.c.l.b16 %v279
    %v725 = vunpack.c.h.b16 %v279
    %v726 = vunpack.c.l.b16 %v280
    %v727 = vunpack.c.l.b16 %v281
    %v728 = vunpack.c.h.b16 %v281
    %v729 = vunpack.c.l.b16 %v282
    %v730 = vunpack.c.l.b16 %v283
    %v731 = vunpack.c.h.b16 %v283
    %v732 = vunpack.c.l.b16 %v284
    %v733 = vunpack.c.l.b16 %v285
    %v734 = vunpack.c.h.b16 %v285
    %v735 = vunpack.c.l.b16 %v286
    %v736 = vunpack.c.l.b16 %v287
    %v737 = vunpack.c.h.b16 %v287
    %v738 = vunpack.c.l.b16 %v288
    %v739 = vunpack.c.l.b16 %v289
    %v740 = vunpack.c.h.b16 %v289
    %v741 = vunpack.c.l.b16 %v290
    %v742 = vunpack.c.l.b16 %v291
    %v743 = vunpack.c.h.b16 %v291
    %v744 = vunpack.c.l.b16 %v292
    %v745 = vunpack.c.l.b16 %v293
    %v746 = vunpack.c.h.b16 %v293
    %v747 = vunpack.c.l.b16 %v294
    %v748 = vunpack.c.l.b16 %v295
    %v749 = vunpack.c.h.b16 %v295
    %v750 = vunpack.c.l.b16 %v296
    %v751 = vunpack.c.l.b16 %v297
    %v752 = vunpack.c.h.b16 %v297
    %v753 = vunpack.c.l.b16 %v298
    %v754 = vunpack.c.l.b16 %v299
    %v755 = vunpack.c.h.b16 %v299
    %v756 = vunpack.c.l.b16 %v300
    %v757 = vunpack.c.l.b16 %v301
    %v758 = vunpack.c.h.b16 %v301
    %v759 = vunpack.c.l.b16 %v302
    %v760 = vunpack.c.l.b16 %v303
    %v761 = vunpack.c.h.b16 %v303
    %v762 = vunpack.c.l.b16 %v304
    %v763 = vunpack.c.l.b16 %v305
    %v764 = vunpack.c.h.b16 %v305
    %v765 = vunpack.c.l.b16 %v306
    %v766 = vunpack.c.l.b16 %v307
    %v767 = vunpack.c.h.b16 %v307
    %v768 = vunpack.c.l.b16 %v308
    %v769 = vunpack.c.l.b16 %v309
    %v770 = vunpack.c.h.b16 %v309
    %v771 = vunpack.c.l.b16 %v310
    %v772 = vunpack.c.l.b16 %v311
    %v773 = vunpack.c.h.b16 %v311
    %v774 = vunpack.c.l.b16 %v312
    %v775 = vunpack.c.l.b16 %v313
    %v776 = vunpack.c.h.b16 %v313
    %v777 = vunpack.c.l.b16 %v314
    %v778 = vunpack.c.l.b16 %v315
    %v779 = vunpack.c.h.b16 %v315
    %v780 = vunpack.c.l.b16 %v316
    %v781 = vunpack.c.l.b16 %v317
    %v782 = vunpack.c.h.b16 %v317
    %v783 = vunpack.c.l.b16 %v318
    %v784 = vunpack.c.l.b16 %v319
    %v785 = vunpack.c.h.b16 %v319
    %v786 = vunpack.c.l.b16 %v320
    %v787 = vunpack.c.l.b16 %v321
    %v788 = vunpack.c.h.b16 %v321
    %v789 = vunpack.c.l.b16 %v322
    %v790 = vunpack.c.l.b16 %v323
    %v791 = vunpack.c.h.b16 %v323
    %v792 = vunpack.c.l.b16 %v324
    %v793 = vunpack.c.l.b16 %v325
    %v794 = vunpack.c.h.b16 %v325
    %v795 = vunpack.c.l.b16 %v326
    %v796 = vunpack.c.l.b16 %v327
    %v797 = vunpack.c.h.b16 %v327
    %v798 = vunpack.c.l.b16 %v328
    %v799 = vunpack.c.l.b16 %v329
    %v800 = vunpack.c.h.b16 %v329
    %v801 = vunpack.c.l.b16 %v330
    %v802 = vunpack.c.l.b16 %v331
    %v803 = vunpack.c.h.b16 %v331
    %v804 = vunpack.c.l.b16 %v332
    %v805 = vunpack.c.l.b16 %v333
    %v806 = vunpack.c.h.b16 %v333
    %v807 = vunpack.c.l.b16 %v334
    %v808 = vunpack.c.l.b16 %v335
    %v809 = vunpack.c.h.b16 %v335
    %v810 = vunpack.c.l.b16 %v336
    %v811 = vunpack.c.l.b16 %v337
    %v812 = vunpack.c.h.b16 %v337
    %v813 = vunpack.c.l.b16 %v338
    %v814 = vunpack.c.l.b16 %v339
    %v815 = vunpack.c.h.b16 %v339
    %v816 = vunpack.c.l.b16 %v340
    %v817 = vunpack.c.l.b16 %v341
    %v818 = vunpack.c.h.b16 %v341
    %v819 = vunpack.c.l.b16 %v342
    %v820 = vunpack.c.l.b16 %v343
    %v821 = vunpack.c.h.b16 %v343
    %v822 = vunpack.c.l.b16 %v344
    %v823 = vunpack.c.l.b16 %v345
    %v824 = vunpack.c.h.b16 %v345
    %v825 = vunpack.c.l.b16 %v346
    %v826 = vunpack.c.l.b16 %v347
    %v827 = vunpack.c.h.b16 %v347
    %v828 = vunpack.c.l.b16 %v348
    %v829 = vunpack.c.l.b16 %v349
    %v830 = vunpack.c.h.b16 %v349
    %v831 = vunpack.c.l.b16 %v350
    %v832 = vunpack.c.l.b16 %v351
    %v833 = vunpack.c.h.b16 %v351
    %v834 = vunpack.c.l.b16 %v352
    %v835 = vunpack.c.l.b16 %v353
    %v836 = vunpack.c.h.b16 %v353
    %v837 = vunpack.c.l.b16 %v354
    %v838 = vunpack.c.l.b16 %v355
    %v839 = vunpack.c.h.b16 %v355
    %v840 = vunpack.c.l.b16 %v356
    %v841 = vunpack.c.l.b16 %v357
    %v842 = vunpack.c.h.b16 %v357
    %v843 = vunpack.c.l.b16 %v358
    %v844 = vunpack.c.l.b16 %v359
    %v845 = vunpack.c.h.b16 %v359
    %v846 = vunpack.c.l.b16 %v360
    %v847 = vunpack.c.l.b16 %v361
    %v848 = vunpack.c.h.b16 %v361
    %v849 = vunpack.c.l.b16 %v362
    %v850 = vunpack.c.l.b16 %v363
    %v851 = vunpack.c.h.b16 %v363
    %v852 = vunpack.c.l.b16 %v364
    %v853 = vunpack.c.l.b16 %v365
    %v854 = vunpack.c.h.b16 %v365
    %v855 = vunpack.c.l.b16 %v366
    %v856 = vunpack.c.l.b16 %v367
    %v857 = vunpack.c.h.b16 %v367
    %v858 = vunpack.c.l.b16 %v368
    %v859 = vunpack.c.l.b16 %v369
    %v860 = vunpack.c.h.b16 %v369
    %v861 = vunpack.c.l.b16 %v370
    %v862 = vunpack.c.l.b16 %v371
    %v863 = vunpack.c.h.b16 %v371
    %v864 = vunpack.c.l.b16 %v372
    %v865 = vunpack.c.l.b16 %v373
    %v866 = vunpack.c.h.b16 %v373
    %v867 = vunpack.c.l.b16 %v374
    %v868 = vunpack.c.l.b16 %v375
    %v869 = vunpack.c.h.b16 %v375
    %v870 = vunpack.c.l.b16 %v376
    %v871 = vunpack.c.l.b16 %v377
    %v872 = vunpack.c.h.b16 %v377
    %v873 = vunpack.c.l.b16 %v378
    %v874 = vunpack.c.l.b16 %v379
    %v875 = vunpack.c.h.b16 %v379
    %v876 = vunpack.c.l.b16 %v380
    %v877 = vunpack.c.l.b16 %v381
    %v878 = vunpack.c.h.b16 %v381
    %v879 = vunpack.c.l.b16 %v382
    %v880 = vpack.c.b16 %v595, %v592
    %v881 = vpack.c.b16 %v596, %v593
    %v882 = vpack.c.b16 %v597, %v594
    %v883 = vpack.c.b16 %v601, %v598
    %v884 = vpack.c.b16 %v602, %v599
    %v885 = vpack.c.b16 %v603, %v600
    %v886 = vpack.c.b16 %v607, %v604
    %v887 = vpack.c.b16 %v608, %v605
    %v888 = vpack.c.b16 %v609, %v606
    %v889 = vpack.c.b16 %v613, %v610
    %v890 = vpack.c.b16 %v614, %v611
    %v891 = vpack.c.b16 %v615, %v612
    %v892 = vpack.c.b16 %v619, %v616
    %v893 = vpack.c.b16 %v620, %v617
    %v894 = vpack.c.b16 %v621, %v618
    %v895 = vpack.c.b16 %v625, %v622
    %v896 = vpack.c.b16 %v626, %v623
    %v897 = vpack.c.b16 %v627, %v624
    %v898 = vpack.c.b16 %v631, %v628
    %v899 = vpack.c.b16 %v632, %v629
    %v900 = vpack.c.b16 %v633, %v630
    %v901 = vpack.c.b16 %v637, %v634
    %v902 = vpack.c.b16 %v638, %v635
    %v903 = vpack.c.b16 %v639, %v636
    %v904 = vpack.c.b16 %v643, %v640
    %v905 = vpack.c.b16 %v644, %v641
    %v906 = vpack.c.b16 %v645, %v642
    %v907 = vpack.c.b16 %v649, %v646
    %v908 = vpack.c.b16 %v650, %v647
    %v909 = vpack.c.b16 %v651, %v648
    %v910 = vpack.c.b16 %v655, %v652
    %v911 = vpack.c.b16 %v656, %v653
    %v912 = vpack.c.b16 %v657, %v654
    %v913 = vpack.c.b16 %v661, %v658
    %v914 = vpack.c.b16 %v662, %v659
    %v915 = vpack.c.b16 %v663, %v660
    %v916 = vpack.c.b16 %v667, %v664
    %v917 = vpack.c.b16 %v668, %v665
    %v918 = vpack.c.b16 %v669, %v666
    %v919 = vpack.c.b16 %v673, %v670
    %v920 = vpack.c.b16 %v674, %v671
    %v921 = vpack.c.b16 %v675, %v672
    %v922 = vpack.c.b16 %v679, %v676
    %v923 = vpack.c.b16 %v680, %v677
    %v924 = vpack.c.b16 %v681, %v678
    %v925 = vpack.c.b16 %v685, %v682
    %v926 = vpack.c.b16 %v686, %v683
    %v927 = vpack.c.b16 %v687, %v684
    %v928 = vpack.c.b16 %v691, %v688
    %v929 = vpack.c.b16 %v692, %v689
    %v930 = vpack.c.b16 %v693, %v690
    %v931 = vpack.c.b16 %v697, %v694
    %v932 = vpack.c.b16 %v698, %v695
    %v933 = vpack.c.b16 %v699, %v696
    %v934 = vpack.c.b16 %v703, %v700
    %v935 = vpack.c.b16 %v704, %v701
    %v936 = vpack.c.b16 %v705, %v702
    %v937 = vpack.c.b16 %v709, %v706
    %v938 = vpack.c.b16 %v710, %v707
    %v939 = vpack.c.b16 %v711, %v708
    %v940 = vpack.c.b16 %v715, %v712
    %v941 = vpack.c.b16 %v716, %v713
    %v942 = vpack.c.b16 %v717, %v714
    %v943 = vpack.c.b16 %v721, %v718
    %v944 = vpack.c.b16 %v722, %v719
    %v945 = vpack.c.b16 %v723, %v720
    %v946 = vpack.c.b16 %v727, %v724
    %v947 = vpack.c.b16 %v728, %v725
    %v948 = vpack.c.b16 %v729, %v726
    %v949 = vpack.c.b16 %v733, %v730
    %v950 = vpack.c.b16 %v734, %v731
    %v951 = vpack.c.b16 %v735, %v732
    %v952 = vpack.c.b16 %v739, %v736
    %v953 = vpack.c.b16 %v740, %v737
    %v954 = vpack.c.b16 %v741, %v738
    %v955 = vpack.c.b16 %v745, %v742
    %v956 = vpack.c.b16 %v746, %v743
    %v957 = vpack.c.b16 %v747, %v744
    %v958 = vpack.c.b16 %v751, %v748
    %v959 = vpack.c.b16 %v752, %v749
    %v960 = vpack.c.b16 %v753, %v750
    %v961 = vpack.c.b16 %v757, %v754
    %v962 = vpack.c.b16 %v758, %v755
    %v963 = vpack.c.b16 %v759, %v756
    %v964 = vpack.c.b16 %v763, %v760
    %v965 = vpack.c.b16 %v764, %v761
    %v966 = vpack.c.b16 %v765, %v762
    %v967 = vpack.c.b16 %v769, %v766
    %v968 = vpack.c.b16 %v770, %v767
    %v969 = vpack.c.b16 %v771, %v768
    %v970 = vpack.c.b16 %v775, %v772
    %v971 = vpack.c.b16 %v776, %v773
    %v972 = vpack.c.b16 %v777, %v774
    %v973 = vpack.c.b16 %v781, %v778
    %v974 = vpack.c.b16 %v782, %v779
    %v975 = vpack.c.b16 %v783, %v780
    %v976 = vpack.c.b16 %v787, %v784
    %v977 = vpack.c.b16 %v788, %v785
    %v978 = vpack.c.b16 %v789, %v786
    %v979 = vpack.c.b16 %v793, %v790
    %v980 = vpack.c.b16 %v794, %v791
    %v981 = vpack.c.b16 %v795, %v792
    %v982 = vpack.c.b16 %v799, %v796
    %v983 = vpack.c.b16 %v800, %v797
    %v984 = vpack.c.b16 %v801, %v798
    %v985 = vpack.c.b16 %v805, %v802
    %v986 = vpack.c.b16 %v806, %v803
    %v987 = vpack.c.b16 %v807, %v804
    %v988 = vpack.c.b16 %v811, %v808
    %v989 = vpack.c.b16 %v812, %v809
    %v990 = vpack.c.b16 %v813, %v810
    %v991 = vpack.c.b16 %v817, %v814
    %v992 = vpack.c.b16 %v818, %v815
    %v993 = vpack.c.b16 %v819, %v816
    %v994 = vpack.c.b16 %v823, %v820
    %v995 = vpack.c.b16 %v824, %v821
    %v996 = vpack.c.b16 %v825, %v822
    %v997 = vpack.c.b16 %v829, %v826
    %v998 = vpack.c.b16 %v830, %v827
    %v999 = vpack.c.b16 %v831, %v828
    %v1000 = vpack.c.b16 %v835, %v832
    %v1001 = vpack.c.b16 %v836, %v833
    %v1002 = vpack.c.b16 %v837, %v834
    %v1003 = vpack.c.b16 %v841, %v838
    %v1004 = vpack.c.b16 %v842, %v839
    %v1005 = vpack.c.b16 %v843, %v840
    %v1006 = vpack.c.b16 %v847, %v844
    %v1007 = vpack.c.b16 %v848, %v845
    %v1008 = vpack.c.b16 %v849, %v846
    %v1009 = vpack.c.b16 %v853, %v850
    %v1010 = vpack.c.b16 %v854, %v851
    %v1011 = vpack.c.b16 %v855, %v852
    %v1012 = vpack.c.b16 %v859, %v856
    %v1013 = vpack.c.b16 %v860, %v857
    %v1014 = vpack.c.b16 %v861, %v858
    %v1015 = vpack.c.b16 %v865, %v862
    %v1016 = vpack.c.b16 %v866, %v863
    %v1017 = vpack.c.b16 %v867, %v864
    %v1018 = vpack.c.b16 %v871, %v868
    %v1019 = vpack.c.b16 %v872, %v869
    %v1020 = vpack.c.b16 %v873, %v870
    %v1021 = vpack.c.b16 %v877, %v874
    %v1022 = vpack.c.b16 %v878, %v875
    %v1023 = vpack.c.b16 %v879, %v876
    %1168 = vmatprep.subr.bf16.mxu0 %v902
    %1169 = vmatpush1.bf16.msra.mxu0 %v901
    %1170 = vmatprep.subr.bf16.mxu0 %v899
    %1171 = vmatpush1.bf16.msra.mxu0 %v898
    %1172 = vmatprep.subr.bf16.mxu0 %v896
    %1173 = vmatpush1.bf16.msra.mxu0 %v895
    %1174 = vmatprep.subr.bf16.mxu0 %v893
    %1175 = vmatpush1.bf16.msra.mxu0 %v892
    %1176 = vmatprep.subr.bf16.mxu0 %v890
    %1177 = vmatpush1.bf16.msra.mxu0 %v889
    %1178 = vmatprep.subr.bf16.mxu0 %v887
    %1179 = vmatpush1.bf16.msra.mxu0 %v886
    %1180 = vmatprep.subr.bf16.mxu0 %v884
    %1181 = vmatpush1.bf16.msra.mxu0 %v883
    %1182 = vmatprep.subr.bf16.mxu0 %v881
    %1183 = vmatpush1.bf16.msra.mxu0 %v880
    %1184 = vmatprep.subr.bf16.mxu0 %v926
    %1185 = vmatpush2.bf16.msra.mxu0 %v925
    %1186 = vmatprep.subr.bf16.mxu0 %v923
    %1187 = vmatpush2.bf16.msra.mxu0 %v922
    %1188 = vmatprep.subr.bf16.mxu0 %v920
    %1189 = vmatpush2.bf16.msra.mxu0 %v919
    %1190 = vmatprep.subr.bf16.mxu0 %v917
    %1191 = vmatpush2.bf16.msra.mxu0 %v916
    %1192 = vmatprep.subr.bf16.mxu0 %v914
    %1193 = vmatpush2.bf16.msra.mxu0 %v913
    %1194 = vmatprep.subr.bf16.mxu0 %v911
    %1195 = vmatpush2.bf16.msra.mxu0 %v910
    %1196 = vmatprep.subr.bf16.mxu0 %v908
    %1197 = vmatpush2.bf16.msra.mxu0 %v907
    %1198 = vmatprep.subr.bf16.mxu0 %v905
    %1199 = vmatpush2.bf16.msra.mxu0 %v904
    %1200 = vmatprep.mubr.bf16.mxu0 %v186
    %1201 = vmatmul.mubr.bf16.gmra.mxu0 %v185
    %v1202 = vpop.f32.mrf.mxu0
    %v1203 = vadd.f32 %v388, %v1202
    %v1204 = vpop.f32.mrf.mxu0
    %v1205 = vadd.f32 %v392, %v1204
    %v1206 = vpop.f32.mrf.mxu0
    %v1207 = vpop.f32.mrf.mxu0
    %1208 = vdwg.mxu0
    %1209 = vmatprep.subr.bf16.mxu0 %v950
    %1210 = vmatpush1.bf16.msra.mxu0 %v949
    %1211 = vmatprep.subr.bf16.mxu0 %v947
    %1212 = vmatpush1.bf16.msra.mxu0 %v946
    %1213 = vmatprep.subr.bf16.mxu0 %v944
    %1214 = vmatpush1.bf16.msra.mxu0 %v943
    %1215 = vmatprep.subr.bf16.mxu0 %v941
    %1216 = vmatpush1.bf16.msra.mxu0 %v940
    %1217 = vmatprep.subr.bf16.mxu0 %v938
    %1218 = vmatpush1.bf16.msra.mxu0 %v937
    %1219 = vmatprep.subr.bf16.mxu0 %v935
    %1220 = vmatpush1.bf16.msra.mxu0 %v934
    %1221 = vmatprep.subr.bf16.mxu0 %v932
    %1222 = vmatpush1.bf16.msra.mxu0 %v931
    %1223 = vmatprep.subr.bf16.mxu0 %v929
    %1224 = vmatpush1.bf16.msra.mxu0 %v928
    %1225 = vmatprep.subr.bf16.mxu0 %v974
    %1226 = vmatpush2.bf16.msra.mxu0 %v973
    %1227 = vmatprep.subr.bf16.mxu0 %v971
    %1228 = vmatpush2.bf16.msra.mxu0 %v970
    %1229 = vmatprep.subr.bf16.mxu0 %v968
    %1230 = vmatpush2.bf16.msra.mxu0 %v967
    %1231 = vmatprep.subr.bf16.mxu0 %v965
    %1232 = vmatpush2.bf16.msra.mxu0 %v964
    %1233 = vmatprep.subr.bf16.mxu0 %v962
    %1234 = vmatpush2.bf16.msra.mxu0 %v961
    %1235 = vmatprep.subr.bf16.mxu0 %v959
    %1236 = vmatpush2.bf16.msra.mxu0 %v958
    %1237 = vmatprep.subr.bf16.mxu0 %v956
    %1238 = vmatpush2.bf16.msra.mxu0 %v955
    %1239 = vmatprep.subr.bf16.mxu0 %v953
    %1240 = vmatpush2.bf16.msra.mxu0 %v952
    %1241 = vmatprep.mubr.bf16.mxu0 %v188
    %1242 = vmatmul.mubr.bf16.gmra.mxu0 %v187
    %v1243 = vpop.f32.mrf.mxu0
    %v1244 = vadd.f32 %v1203, %v1243
    %v1245 = vpop.f32.mrf.mxu0
    %v1246 = vadd.f32 %v1205, %v1245
    %v1247 = vpop.f32.mrf.mxu0
    %v1248 = vpop.f32.mrf.mxu0
    %1249 = vdwg.mxu0
    %1250 = vmatprep.subr.bf16.mxu0 %v998
    %1251 = vmatpush1.bf16.msra.mxu0 %v997
    %1252 = vmatprep.subr.bf16.mxu0 %v995
    %1253 = vmatpush1.bf16.msra.mxu0 %v994
    %1254 = vmatprep.subr.bf16.mxu0 %v992
    %1255 = vmatpush1.bf16.msra.mxu0 %v991
    %1256 = vmatprep.subr.bf16.mxu0 %v989
    %1257 = vmatpush1.bf16.msra.mxu0 %v988
    %1258 = vmatprep.subr.bf16.mxu0 %v986
    %1259 = vmatpush1.bf16.msra.mxu0 %v985
    %1260 = vmatprep.subr.bf16.mxu0 %v983
    %1261 = vmatpush1.bf16.msra.mxu0 %v982
    %1262 = vmatprep.subr.bf16.mxu0 %v980
    %1263 = vmatpush1.bf16.msra.mxu0 %v979
    %1264 = vmatprep.subr.bf16.mxu0 %v977
    %1265 = vmatpush1.bf16.msra.mxu0 %v976
    %1266 = vmatprep.subr.bf16.mxu0 %v1022
    %1267 = vmatpush2.bf16.msra.mxu0 %v1021
    %1268 = vmatprep.subr.bf16.mxu0 %v1019
    %1269 = vmatpush2.bf16.msra.mxu0 %v1018
    %1270 = vmatprep.subr.bf16.mxu0 %v1016
    %1271 = vmatpush2.bf16.msra.mxu0 %v1015
    %1272 = vmatprep.subr.bf16.mxu0 %v1013
    %1273 = vmatpush2.bf16.msra.mxu0 %v1012
    %1274 = vmatprep.subr.bf16.mxu0 %v1010
    %1275 = vmatpush2.bf16.msra.mxu0 %v1009
    %1276 = vmatprep.subr.bf16.mxu0 %v1007
    %1277 = vmatpush2.bf16.msra.mxu0 %v1006
    %1278 = vmatprep.subr.bf16.mxu0 %v1004
    %1279 = vmatpush2.bf16.msra.mxu0 %v1003
    %1280 = vmatprep.subr.bf16.mxu0 %v1001
    %1281 = vmatpush2.bf16.msra.mxu0 %v1000
    %1282 = vmatprep.mubr.bf16.mxu0 %v190
    %1283 = vmatmul.mubr.bf16.gmra.mxu0 %v189
    %v1284 = vpop.f32.mrf.mxu0
    %v1285 = vadd.f32 %v1244, %v1284
    %v1286 = vpop.f32.mrf.mxu0
    %v1287 = vadd.f32 %v1246, %v1286
    %v1288 = vpop.f32.mrf.mxu0
    %v1289 = vpop.f32.mrf.mxu0
    %1290 = vdwg.mxu0
    %1291 = vmatprep.subr.bf16.mxu0 0
    %1292 = vmatpush1.bf16.msra.mxu0 %v903
    %1293 = vmatprep.subr.bf16.mxu0 0
    %1294 = vmatpush1.bf16.msra.mxu0 %v900
    %1295 = vmatprep.subr.bf16.mxu0 0
    %1296 = vmatpush1.bf16.msra.mxu0 %v897
    %1297 = vmatprep.subr.bf16.mxu0 0
    %1298 = vmatpush1.bf16.msra.mxu0 %v894
    %1299 = vmatprep.subr.bf16.mxu0 0
    %1300 = vmatpush1.bf16.msra.mxu0 %v891
    %1301 = vmatprep.subr.bf16.mxu0 0
    %1302 = vmatpush1.bf16.msra.mxu0 %v888
    %1303 = vmatprep.subr.bf16.mxu0 0
    %1304 = vmatpush1.bf16.msra.mxu0 %v885
    %1305 = vmatprep.subr.bf16.mxu0 0
    %1306 = vmatpush1.bf16.msra.mxu0 %v882
    %1307 = vmatprep.subr.bf16.mxu0 0
    %1308 = vmatpush2.bf16.msra.mxu0 %v927
    %1309 = vmatprep.subr.bf16.mxu0 0
    %1310 = vmatpush2.bf16.msra.mxu0 %v924
    %1311 = vmatprep.subr.bf16.mxu0 0
    %1312 = vmatpush2.bf16.msra.mxu0 %v921
    %1313 = vmatprep.subr.bf16.mxu0 0
    %1314 = vmatpush2.bf16.msra.mxu0 %v918
    %1315 = vmatprep.subr.bf16.mxu0 0
    %1316 = vmatpush2.bf16.msra.mxu0 %v915
    %1317 = vmatprep.subr.bf16.mxu0 0
    %1318 = vmatpush2.bf16.msra.mxu0 %v912
    %1319 = vmatprep.subr.bf16.mxu0 0
    %1320 = vmatpush2.bf16.msra.mxu0 %v909
    %1321 = vmatprep.subr.bf16.mxu0 0
    %1322 = vmatpush2.bf16.msra.mxu0 %v906
    %1323 = vmatprep.mubr.bf16.mxu0 %v186
    %1324 = vmatmul.mubr.bf16.gmra.mxu0 %v185
    %v1325 = vpop.f32.mrf.mxu0
    %v1326 = vadd.f32 %v396, %v1325
    %v1327 = vpop.f32.mrf.mxu0
    %v1328 = vpop.f32.mrf.mxu0
    %v1329 = vpop.f32.mrf.mxu0
    %1330 = vdwg.mxu0
    %1331 = vmatprep.subr.bf16.mxu0 0
    %1332 = vmatpush1.bf16.msra.mxu0 %v951
    %1333 = vmatprep.subr.bf16.mxu0 0
    %1334 = vmatpush1.bf16.msra.mxu0 %v948
    %1335 = vmatprep.subr.bf16.mxu0 0
    %1336 = vmatpush1.bf16.msra.mxu0 %v945
    %1337 = vmatprep.subr.bf16.mxu0 0
    %1338 = vmatpush1.bf16.msra.mxu0 %v942
    %1339 = vmatprep.subr.bf16.mxu0 0
    %1340 = vmatpush1.bf16.msra.mxu0 %v939
    %1341 = vmatprep.subr.bf16.mxu0 0
    %1342 = vmatpush1.bf16.msra.mxu0 %v936
    %1343 = vmatprep.subr.bf16.mxu0 0
    %1344 = vmatpush1.bf16.msra.mxu0 %v933
    %1345 = vmatprep.subr.bf16.mxu0 0
    %1346 = vmatpush1.bf16.msra.mxu0 %v930
    %1347 = vmatprep.subr.bf16.mxu0 0
    %1348 = vmatpush2.bf16.msra.mxu0 %v975
    %1349 = vmatprep.subr.bf16.mxu0 0
    %1350 = vmatpush2.bf16.msra.mxu0 %v972
    %1351 = vmatprep.subr.bf16.mxu0 0
    %1352 = vmatpush2.bf16.msra.mxu0 %v969
    %1353 = vmatprep.subr.bf16.mxu0 0
    %1354 = vmatpush2.bf16.msra.mxu0 %v966
    %1355 = vmatprep.subr.bf16.mxu0 0
    %1356 = vmatpush2.bf16.msra.mxu0 %v963
    %1357 = vmatprep.subr.bf16.mxu0 0
    %1358 = vmatpush2.bf16.msra.mxu0 %v960
    %1359 = vmatprep.subr.bf16.mxu0 0
    %1360 = vmatpush2.bf16.msra.mxu0 %v957
    %1361 = vmatprep.subr.bf16.mxu0 0
    %1362 = vmatpush2.bf16.msra.mxu0 %v954
    %1363 = vmatprep.mubr.bf16.mxu0 %v188
    %1364 = vmatmul.mubr.bf16.gmra.mxu0 %v187
    %v1365 = vpop.f32.mrf.mxu0
    %v1366 = vadd.f32 %v1326, %v1365
    %v1367 = vpop.f32.mrf.mxu0
    %v1368 = vpop.f32.mrf.mxu0
    %v1369 = vpop.f32.mrf.mxu0
    %1370 = vdwg.mxu0
    %1371 = vmatprep.subr.bf16.mxu0 0
    %1372 = vmatpush1.bf16.msra.mxu0 %v999
    %1373 = vmatprep.subr.bf16.mxu0 0
    %1374 = vmatpush1.bf16.msra.mxu0 %v996
    %1375 = vmatprep.subr.bf16.mxu0 0
    %1376 = vmatpush1.bf16.msra.mxu0 %v993
    %1377 = vmatprep.subr.bf16.mxu0 0
    %1378 = vmatpush1.bf16.msra.mxu0 %v990
    %1379 = vmatprep.subr.bf16.mxu0 0
    %1380 = vmatpush1.bf16.msra.mxu0 %v987
    %1381 = vmatprep.subr.bf16.mxu0 0
    %1382 = vmatpush1.bf16.msra.mxu0 %v984
    %1383 = vmatprep.subr.bf16.mxu0 0
    %1384 = vmatpush1.bf16.msra.mxu0 %v981
    %1385 = vmatprep.subr.bf16.mxu0 0
    %1386 = vmatpush1.bf16.msra.mxu0 %v978
    %1387 = vmatprep.subr.bf16.mxu0 0
    %1388 = vmatpush2.bf16.msra.mxu0 %v1023
    %1389 = vmatprep.subr.bf16.mxu0 0
    %1390 = vmatpush2.bf16.msra.mxu0 %v1020
    %1391 = vmatprep.subr.bf16.mxu0 0
    %1392 = vmatpush2.bf16.msra.mxu0 %v1017
    %1393 = vmatprep.subr.bf16.mxu0 0
    %1394 = vmatpush2.bf16.msra.mxu0 %v1014
    %1395 = vmatprep.subr.bf16.mxu0 0
    %1396 = vmatpush2.bf16.msra.mxu0 %v1011
    %1397 = vmatprep.subr.bf16.mxu0 0
    %1398 = vmatpush2.bf16.msra.mxu0 %v1008
    %1399 = vmatprep.subr.bf16.mxu0 0
    %1400 = vmatpush2.bf16.msra.mxu0 %v1005
    %1401 = vmatprep.subr.bf16.mxu0 0
    %1402 = vmatpush2.bf16.msra.mxu0 %v1002
    %1403 = vmatprep.mubr.bf16.mxu0 %v190
    %1404 = vmatmul.mubr.bf16.gmra.mxu0 %v189
    %v1405 = vpop.f32.mrf.mxu0
    %v1406 = vadd.f32 %v1366, %v1405
    %v1407 = vpop.f32.mrf.mxu0
    %v1408 = vpop.f32.mrf.mxu0
    %v1409 = vpop.f32.mrf.mxu0
    %1410 = vdwg.mxu0
    %v1411 = vtanh.pop %v1285
    %v1412 = vtanh.pop %v1287
    %v1413 = vtanh.pop %v1406
    %v1414 = vld [vmem:[#allocation5] sm:$0x3]
    %v1415 = vld [vmem:[%s4] sm:$0xff]
    %v1416 = vld [vmem:[%s4 + $0x8] sm:$0xff]
    %v1417 = vld [vmem:[%s5] sm:$0x3]
    %v1419 = vlaneseq
    %v1420 = vshrl.u32 %v1419, 7
    %v1421 = vsub.s32 0, %v1420
    %v1422 = vrot.slane %v1417, %v1421
    %v1423 = vlaneseq
    %v1424 = vshrl.u32 %v1423, 7
    %v1425 = vsub.s32 1, %v1424
    %v1426 = vrot.slane %v1417, %v1425
    %vm1429 = vcmask 64512
    %v1431 = vsel %vm1429, %v1414, 0
    %1433 = vmatprep.subr.mxu0 0.0
    %1434 = vmatpush1.msra.mxu0 0.0
    %1435 = vmatprep.subr.mxu0 0.0
    %1436 = vmatpush1.msra.mxu0 0.0
    %1437 = vmatprep.subr.mxu0 0.0
    %1438 = vmatpush1.msra.mxu0 0.0
    %1439 = vmatprep.subr.mxu0 0.0
    %1440 = vmatpush1.msra.mxu0 0.0
    %1441 = vmatprep.subr.mxu0 0.0
    %1442 = vmatpush1.msra.mxu0 0.0
    %1443 = vmatprep.subr.mxu0 0.0
    %1444 = vmatpush1.msra.mxu0 0.0
    %1445 = vmatprep.subr.mxu0 0.0
    %1446 = vmatpush1.msra.mxu0 0.0
    %1447 = vmatprep.subr.mxu0 0.0
    %1448 = vmatpush1.msra.mxu0 0.0
    %1449 = vmatprep.subr.mxu0 0.0
    %1450 = vmatpush1.msra.mxu0 0.0
    %1451 = vmatprep.subr.mxu0 0.0
    %1452 = vmatpush1.msra.mxu0 0.0
    %1453 = vmatprep.subr.mxu0 0.0
    %1454 = vmatpush1.msra.mxu0 0.0
    %1455 = vmatprep.subr.mxu0 0.0
    %1456 = vmatpush1.msra.mxu0 0.0
    %1457 = vmatprep.subr.mxu0 0.0
    %1458 = vmatpush1.msra.mxu0 0.0
    %1459 = vmatprep.subr.mxu0 0.0
    %1460 = vmatpush1.msra.mxu0 0.0
    %1461 = vmatprep.subr.mxu0 0.0
    %1462 = vmatpush1.msra.mxu0 0.0
    %1463 = vmatprep.subr.mxu0 %v1416
    %1464 = vmatpush1.msra.mxu0 %v1415
    %1465 = vmatprep.subr.mxu0 0.0
    %1466 = vmatpush2.msra.mxu0 0.0
    %1467 = vmatprep.subr.mxu0 0.0
    %1468 = vmatpush2.msra.mxu0 0.0
    %1469 = vmatprep.subr.mxu0 0.0
    %1470 = vmatpush2.msra.mxu0 0.0
    %1471 = vmatprep.subr.mxu0 0.0
    %1472 = vmatpush2.msra.mxu0 0.0
    %1473 = vmatprep.subr.mxu0 0.0
    %1474 = vmatpush2.msra.mxu0 0.0
    %1475 = vmatprep.subr.mxu0 0.0
    %1476 = vmatpush2.msra.mxu0 0.0
    %1477 = vmatprep.subr.mxu0 0.0
    %1478 = vmatpush2.msra.mxu0 0.0
    %1479 = vmatprep.subr.mxu0 0.0
    %1480 = vmatpush2.msra.mxu0 0.0
    %1481 = vmatprep.subr.mxu0 0.0
    %1482 = vmatpush2.msra.mxu0 0.0
    %1483 = vmatprep.subr.mxu0 0.0
    %1484 = vmatpush2.msra.mxu0 0.0
    %1485 = vmatprep.subr.mxu0 0.0
    %1486 = vmatpush2.msra.mxu0 0.0
    %1487 = vmatprep.subr.mxu0 0.0
    %1488 = vmatpush2.msra.mxu0 0.0
    %1489 = vmatprep.subr.mxu0 0.0
    %1490 = vmatpush2.msra.mxu0 0.0
    %1491 = vmatprep.subr.mxu0 0.0
    %1492 = vmatpush2.msra.mxu0 0.0
    %1493 = vmatprep.subr.mxu0 0.0
    %1494 = vmatpush2.msra.mxu0 0.0
    %1495 = vmatprep.subr.mxu0 0.0
    %1496 = vmatpush2.msra.mxu0 0.0
    %1497 = vmatprep.mubr.f32.mxu0 0.0
    %1498 = vmatmul.mubr.f32.gmra.mxu0 %v1431
    %v1499 = vpop.f32.mrf.mxu0
    %v1500 = vadd.f32 %v1422, %v1499
    %v1501 = vpop.f32.mrf.mxu0
    %v1502 = vadd.f32 %v1426, %v1501
    %1503 = vdwg.mxu0
    %v1504 = vtanh.pop %v1500
    %v1505 = vtanh.pop %v1502
    %v1506 = vpack.c.bf16 %v1411, %v1411
    %v1507 = vpack.c.bf16 %v1412, %v1412
    %v1508 = vpack.c.bf16 %v1413, %v1413
    %v1509 = vld [vmem:[#allocation10] sm:$0xff]
    %v1510 = vld [vmem:[#allocation10 + $0x8] sm:$0xf]
    %v1511 = vld [vmem:[#allocation10 + $0xc] sm:$0xff]
    %v1512 = vld [vmem:[#allocation10 + $0x14] sm:$0xf]
    %v1513 = vld [vmem:[#allocation10 + $0x18] sm:$0xff]
    %v1514 = vld [vmem:[#allocation10 + $0x20] sm:$0xf]
    %v1515 = vld [vmem:[#allocation10 + $0x24] sm:$0xff]
    %v1516 = vld [vmem:[#allocation10 + $0x2c] sm:$0xf]
    %v1517 = vld [vmem:[#allocation10 + $0x30] sm:$0xff]
    %v1518 = vld [vmem:[#allocation10 + $0x38] sm:$0xf]
    %v1519 = vld [vmem:[#allocation10 + $0x3c] sm:$0xff]
    %v1520 = vld [vmem:[#allocation10 + $0x44] sm:$0xf]
    %v1521 = vld [vmem:[#allocation10 + $0x48] sm:$0xff]
    %v1522 = vld [vmem:[#allocation10 + $0x50] sm:$0xf]
    %v1523 = vld [vmem:[#allocation10 + $0x54] sm:$0xff]
    %v1524 = vld [vmem:[#allocation10 + $0x5c] sm:$0xf]
    %v1525 = vld [vmem:[#allocation10 + $0x60] sm:$0xff]
    %v1526 = vld [vmem:[#allocation10 + $0x68] sm:$0xf]
    %v1527 = vld [vmem:[#allocation10 + $0x6c] sm:$0xff]
    %v1528 = vld [vmem:[#allocation10 + $0x74] sm:$0xf]
    %v1529 = vld [vmem:[#allocation10 + $0x78] sm:$0xff]
    %v1530 = vld [vmem:[#allocation10 + $0x80] sm:$0xf]
    %v1531 = vld [vmem:[#allocation10 + $0x84] sm:$0xff]
    %v1532 = vld [vmem:[#allocation10 + $0x8c] sm:$0xf]
    %v1533 = vld [vmem:[#allocation10 + $0x90] sm:$0xff]
    %v1534 = vld [vmem:[#allocation10 + $0x98] sm:$0xf]
    %v1535 = vld [vmem:[#allocation10 + $0x9c] sm:$0xff]
    %v1536 = vld [vmem:[#allocation10 + $0xa4] sm:$0xf]
    %v1537 = vld [vmem:[#allocation10 + $0xa8] sm:$0xff]
    %v1538 = vld [vmem:[#allocation10 + $0xb0] sm:$0xf]
    %v1539 = vld [vmem:[#allocation10 + $0xb4] sm:$0xff]
    %v1540 = vld [vmem:[#allocation10 + $0xbc] sm:$0xf]
    %v1541 = vld [vmem:[#allocation10 + $0xc0] sm:$0xff]
    %v1542 = vld [vmem:[#allocation10 + $0xc8] sm:$0xf]
    %v1543 = vld [vmem:[#allocation10 + $0xcc] sm:$0xff]
    %v1544 = vld [vmem:[#allocation10 + $0xd4] sm:$0xf]
    %v1545 = vld [vmem:[#allocation10 + $0xd8] sm:$0xff]
    %v1546 = vld [vmem:[#allocation10 + $0xe0] sm:$0xf]
    %v1547 = vld [vmem:[#allocation10 + $0xe4] sm:$0xff]
    %v1548 = vld [vmem:[#allocation10 + $0xec] sm:$0xf]
    %v1549 = vld [vmem:[#allocation10 + $0xf0] sm:$0xff]
    %v1550 = vld [vmem:[#allocation10 + $0xf8] sm:$0xf]
    %v1551 = vld [vmem:[#allocation10 + $0xfc] sm:$0xff]
    %v1552 = vld [vmem:[#allocation10 + $0x104] sm:$0xf]
    %v1553 = vld [vmem:[#allocation10 + $0x108] sm:$0xff]
    %v1554 = vld [vmem:[#allocation10 + $0x110] sm:$0xf]
    %v1555 = vld [vmem:[#allocation10 + $0x114] sm:$0xff]
    %v1556 = vld [vmem:[#allocation10 + $0x11c] sm:$0xf]
    %v1557 = vld [vmem:[#allocation10 + $0x120] sm:$0xff]
    %v1558 = vld [vmem:[#allocation10 + $0x128] sm:$0xf]
    %v1559 = vld [vmem:[#allocation10 + $0x12c] sm:$0xff]
    %v1560 = vld [vmem:[#allocation10 + $0x134] sm:$0xf]
    %v1561 = vld [vmem:[#allocation10 + $0x138] sm:$0xff]
    %v1562 = vld [vmem:[#allocation10 + $0x140] sm:$0xf]
    %v1563 = vld [vmem:[#allocation10 + $0x144] sm:$0xff]
    %v1564 = vld [vmem:[#allocation10 + $0x14c] sm:$0xf]
    %v1565 = vld [vmem:[#allocation10 + $0x150] sm:$0xff]
    %v1566 = vld [vmem:[#allocation10 + $0x158] sm:$0xf]
    %v1567 = vld [vmem:[#allocation10 + $0x15c] sm:$0xff]
    %v1568 = vld [vmem:[#allocation10 + $0x164] sm:$0xf]
    %v1569 = vld [vmem:[#allocation10 + $0x168] sm:$0xff]
    %v1570 = vld [vmem:[#allocation10 + $0x170] sm:$0xf]
    %v1571 = vld [vmem:[#allocation10 + $0x174] sm:$0xff]
    %v1572 = vld [vmem:[#allocation10 + $0x17c] sm:$0xf]
    %v1573 = vld [vmem:[#allocation10 + $0x180] sm:$0xff]
    %v1574 = vld [vmem:[#allocation10 + $0x188] sm:$0xf]
    %v1575 = vld [vmem:[#allocation10 + $0x18c] sm:$0xff]
    %v1576 = vld [vmem:[#allocation10 + $0x194] sm:$0xf]
    %v1577 = vld [vmem:[#allocation10 + $0x198] sm:$0xff]
    %v1578 = vld [vmem:[#allocation10 + $0x1a0] sm:$0xf]
    %v1579 = vld [vmem:[#allocation10 + $0x1a4] sm:$0xff]
    %v1580 = vld [vmem:[#allocation10 + $0x1ac] sm:$0xf]
    %v1581 = vld [vmem:[#allocation10 + $0x1b0] sm:$0xff]
    %v1582 = vld [vmem:[#allocation10 + $0x1b8] sm:$0xf]
    %v1583 = vld [vmem:[#allocation10 + $0x1bc] sm:$0xff]
    %v1584 = vld [vmem:[#allocation10 + $0x1c4] sm:$0xf]
    %v1585 = vld [vmem:[#allocation10 + $0x1c8] sm:$0xff]
    %v1586 = vld [vmem:[#allocation10 + $0x1d0] sm:$0xf]
    %v1587 = vld [vmem:[#allocation10 + $0x1d4] sm:$0xff]
    %v1588 = vld [vmem:[#allocation10 + $0x1dc] sm:$0xf]
    %v1589 = vld [vmem:[#allocation10 + $0x1e0] sm:$0xff]
    %v1590 = vld [vmem:[#allocation10 + $0x1e8] sm:$0xf]
    %v1591 = vld [vmem:[#allocation10 + $0x1ec] sm:$0xff]
    %v1592 = vld [vmem:[#allocation10 + $0x1f4] sm:$0xf]
    %v1593 = vld [vmem:[#allocation10 + $0x1f8] sm:$0xff]
    %v1594 = vld [vmem:[#allocation10 + $0x200] sm:$0xf]
    %v1595 = vld [vmem:[#allocation10 + $0x204] sm:$0xff]
    %v1596 = vld [vmem:[#allocation10 + $0x20c] sm:$0xf]
    %v1597 = vld [vmem:[#allocation10 + $0x210] sm:$0xff]
    %v1598 = vld [vmem:[#allocation10 + $0x218] sm:$0xf]
    %v1599 = vld [vmem:[#allocation10 + $0x21c] sm:$0xff]
    %v1600 = vld [vmem:[#allocation10 + $0x224] sm:$0xf]
    %v1601 = vld [vmem:[#allocation10 + $0x228] sm:$0xff]
    %v1602 = vld [vmem:[#allocation10 + $0x230] sm:$0xf]
    %v1603 = vld [vmem:[#allocation10 + $0x234] sm:$0xff]
    %v1604 = vld [vmem:[#allocation10 + $0x23c] sm:$0xf]
    %v1605 = vpack.c.bf16 %v1504, %v1504
    %v1606 = vpack.c.bf16 %v1505, %v1505
    %v1607 = vld [vmem:[#allocation11] sm:$0xff]
    %v1608 = vld [vmem:[#allocation11 + $0x8] sm:$0xf]
    %v1609 = vld [vmem:[#allocation11 + $0xc] sm:$0xff]
    %v1610 = vld [vmem:[#allocation11 + $0x14] sm:$0xf]
    %v1611 = vld [vmem:[#allocation11 + $0x18] sm:$0xff]
    %v1612 = vld [vmem:[#allocation11 + $0x20] sm:$0xf]
    %v1613 = vld [vmem:[#allocation11 + $0x24] sm:$0xff]
    %v1614 = vld [vmem:[#allocation11 + $0x2c] sm:$0xf]
    %v1615 = vld [vmem:[#allocation11 + $0x30] sm:$0xff]
    %v1616 = vld [vmem:[#allocation11 + $0x38] sm:$0xf]
    %v1617 = vld [vmem:[#allocation11 + $0x3c] sm:$0xff]
    %v1618 = vld [vmem:[#allocation11 + $0x44] sm:$0xf]
    %v1619 = vld [vmem:[#allocation11 + $0x48] sm:$0xff]
    %v1620 = vld [vmem:[#allocation11 + $0x50] sm:$0xf]
    %v1621 = vld [vmem:[#allocation11 + $0x54] sm:$0xff]
    %v1622 = vld [vmem:[#allocation11 + $0x5c] sm:$0xf]
    %v1623 = vld [vmem:[#allocation11 + $0x60] sm:$0xff]
    %v1624 = vld [vmem:[#allocation11 + $0x68] sm:$0xf]
    %v1625 = vld [vmem:[#allocation11 + $0x6c] sm:$0xff]
    %v1626 = vld [vmem:[#allocation11 + $0x74] sm:$0xf]
    %v1627 = vld [vmem:[#allocation11 + $0x78] sm:$0xff]
    %v1628 = vld [vmem:[#allocation11 + $0x80] sm:$0xf]
    %v1629 = vld [vmem:[#allocation11 + $0x84] sm:$0xff]
    %v1630 = vld [vmem:[#allocation11 + $0x8c] sm:$0xf]
    %v1631 = vld [vmem:[#allocation11 + $0x90] sm:$0xff]
    %v1632 = vld [vmem:[#allocation11 + $0x98] sm:$0xf]
    %v1633 = vld [vmem:[#allocation11 + $0x9c] sm:$0xff]
    %v1634 = vld [vmem:[#allocation11 + $0xa4] sm:$0xf]
    %v1635 = vld [vmem:[#allocation11 + $0xa8] sm:$0xff]
    %v1636 = vld [vmem:[#allocation11 + $0xb0] sm:$0xf]
    %v1637 = vld [vmem:[#allocation11 + $0xb4] sm:$0xff]
    %v1638 = vld [vmem:[#allocation11 + $0xbc] sm:$0xf]
    %v1639 = vld [vmem:[#allocation11 + $0xc0] sm:$0xff]
    %v1640 = vld [vmem:[#allocation11 + $0xc8] sm:$0xf]
    %v1641 = vld [vmem:[#allocation11 + $0xcc] sm:$0xff]
    %v1642 = vld [vmem:[#allocation11 + $0xd4] sm:$0xf]
    %v1643 = vld [vmem:[#allocation11 + $0xd8] sm:$0xff]
    %v1644 = vld [vmem:[#allocation11 + $0xe0] sm:$0xf]
    %v1645 = vld [vmem:[#allocation11 + $0xe4] sm:$0xff]
    %v1646 = vld [vmem:[#allocation11 + $0xec] sm:$0xf]
    %v1647 = vld [vmem:[#allocation11 + $0xf0] sm:$0xff]
    %v1648 = vld [vmem:[#allocation11 + $0xf8] sm:$0xf]
    %v1649 = vld [vmem:[#allocation11 + $0xfc] sm:$0xff]
    %v1650 = vld [vmem:[#allocation11 + $0x104] sm:$0xf]
    %v1651 = vld [vmem:[#allocation11 + $0x108] sm:$0xff]
    %v1652 = vld [vmem:[#allocation11 + $0x110] sm:$0xf]
    %v1653 = vld [vmem:[#allocation11 + $0x114] sm:$0xff]
    %v1654 = vld [vmem:[#allocation11 + $0x11c] sm:$0xf]
    %v1703 = vunpack.c.l.b16 %v1607
    %v1704 = vunpack.c.h.b16 %v1607
    %v1705 = vunpack.c.l.b16 %v1608
    %v1706 = vunpack.c.l.b16 %v1609
    %v1707 = vunpack.c.h.b16 %v1609
    %v1708 = vunpack.c.l.b16 %v1610
    %v1709 = vunpack.c.l.b16 %v1611
    %v1710 = vunpack.c.h.b16 %v1611
    %v1711 = vunpack.c.l.b16 %v1612
    %v1712 = vunpack.c.l.b16 %v1613
    %v1713 = vunpack.c.h.b16 %v1613
    %v1714 = vunpack.c.l.b16 %v1614
    %v1715 = vunpack.c.l.b16 %v1615
    %v1716 = vunpack.c.h.b16 %v1615
    %v1717 = vunpack.c.l.b16 %v1616
    %v1718 = vunpack.c.l.b16 %v1617
    %v1719 = vunpack.c.h.b16 %v1617
    %v1720 = vunpack.c.l.b16 %v1618
    %v1721 = vunpack.c.l.b16 %v1619
    %v1722 = vunpack.c.h.b16 %v1619
    %v1723 = vunpack.c.l.b16 %v1620
    %v1724 = vunpack.c.l.b16 %v1621
    %v1725 = vunpack.c.h.b16 %v1621
    %v1726 = vunpack.c.l.b16 %v1622
    %v1727 = vunpack.c.l.b16 %v1623
    %v1728 = vunpack.c.h.b16 %v1623
    %v1729 = vunpack.c.l.b16 %v1624
    %v1730 = vunpack.c.l.b16 %v1625
    %v1731 = vunpack.c.h.b16 %v1625
    %v1732 = vunpack.c.l.b16 %v1626
    %v1733 = vunpack.c.l.b16 %v1627
    %v1734 = vunpack.c.h.b16 %v1627
    %v1735 = vunpack.c.l.b16 %v1628
    %v1736 = vunpack.c.l.b16 %v1629
    %v1737 = vunpack.c.h.b16 %v1629
    %v1738 = vunpack.c.l.b16 %v1630
    %v1739 = vunpack.c.l.b16 %v1631
    %v1740 = vunpack.c.h.b16 %v1631
    %v1741 = vunpack.c.l.b16 %v1632
    %v1742 = vunpack.c.l.b16 %v1633
    %v1743 = vunpack.c.h.b16 %v1633
    %v1744 = vunpack.c.l.b16 %v1634
    %v1745 = vunpack.c.l.b16 %v1635
    %v1746 = vunpack.c.h.b16 %v1635
    %v1747 = vunpack.c.l.b16 %v1636
    %v1748 = vunpack.c.l.b16 %v1637
    %v1749 = vunpack.c.h.b16 %v1637
    %v1750 = vunpack.c.l.b16 %v1638
    %v1751 = vunpack.c.l.b16 %v1639
    %v1752 = vunpack.c.h.b16 %v1639
    %v1753 = vunpack.c.l.b16 %v1640
    %v1754 = vunpack.c.l.b16 %v1641
    %v1755 = vunpack.c.h.b16 %v1641
    %v1756 = vunpack.c.l.b16 %v1642
    %v1757 = vunpack.c.l.b16 %v1643
    %v1758 = vunpack.c.h.b16 %v1643
    %v1759 = vunpack.c.l.b16 %v1644
    %v1760 = vunpack.c.l.b16 %v1645
    %v1761 = vunpack.c.h.b16 %v1645
    %v1762 = vunpack.c.l.b16 %v1646
    %v1763 = vunpack.c.l.b16 %v1647
    %v1764 = vunpack.c.h.b16 %v1647
    %v1765 = vunpack.c.l.b16 %v1648
    %v1766 = vunpack.c.l.b16 %v1649
    %v1767 = vunpack.c.h.b16 %v1649
    %v1768 = vunpack.c.l.b16 %v1650
    %v1769 = vunpack.c.l.b16 %v1651
    %v1770 = vunpack.c.h.b16 %v1651
    %v1771 = vunpack.c.l.b16 %v1652
    %v1772 = vunpack.c.l.b16 %v1653
    %v1773 = vunpack.c.h.b16 %v1653
    %v1774 = vunpack.c.l.b16 %v1654
    %v1775 = vpack.c.b16 %v1706, %v1703
    %v1776 = vpack.c.b16 %v1707, %v1704
    %v1777 = vpack.c.b16 %v1708, %v1705
    %v1778 = vpack.c.b16 %v1712, %v1709
    %v1779 = vpack.c.b16 %v1713, %v1710
    %v1780 = vpack.c.b16 %v1714, %v1711
    %v1781 = vpack.c.b16 %v1718, %v1715
    %v1782 = vpack.c.b16 %v1719, %v1716
    %v1783 = vpack.c.b16 %v1720, %v1717
    %v1784 = vpack.c.b16 %v1724, %v1721
    %v1785 = vpack.c.b16 %v1725, %v1722
    %v1786 = vpack.c.b16 %v1726, %v1723
    %v1787 = vpack.c.b16 %v1730, %v1727
    %v1788 = vpack.c.b16 %v1731, %v1728
    %v1789 = vpack.c.b16 %v1732, %v1729
    %v1790 = vpack.c.b16 %v1736, %v1733
    %v1791 = vpack.c.b16 %v1737, %v1734
    %v1792 = vpack.c.b16 %v1738, %v1735
    %v1793 = vpack.c.b16 %v1742, %v1739
    %v1794 = vpack.c.b16 %v1743, %v1740
    %v1795 = vpack.c.b16 %v1744, %v1741
    %v1796 = vpack.c.b16 %v1748, %v1745
    %v1797 = vpack.c.b16 %v1749, %v1746
    %v1798 = vpack.c.b16 %v1750, %v1747
    %v1799 = vpack.c.b16 %v1754, %v1751
    %v1800 = vpack.c.b16 %v1755, %v1752
    %v1801 = vpack.c.b16 %v1756, %v1753
    %v1802 = vpack.c.b16 %v1760, %v1757
    %v1803 = vpack.c.b16 %v1761, %v1758
    %v1804 = vpack.c.b16 %v1762, %v1759
    %v1805 = vpack.c.b16 %v1766, %v1763
    %v1806 = vpack.c.b16 %v1767, %v1764
    %v1807 = vpack.c.b16 %v1768, %v1765
    %v1808 = vpack.c.b16 %v1772, %v1769
    %v1809 = vpack.c.b16 %v1773, %v1770
    %v1810 = vpack.c.b16 %v1774, %v1771
    %vm1847 = vcmask 523264
    %v1849 = vsel %vm1847, %v1606, 0
    %1851 = vmatprep.subr.bf16.mxu0 %v1797
    %1852 = vmatpush1.bf16.msra.mxu0 %v1796
    %1853 = vmatprep.subr.bf16.mxu0 %v1794
    %1854 = vmatpush1.bf16.msra.mxu0 %v1793
    %1855 = vmatprep.subr.bf16.mxu0 %v1791
    %1856 = vmatpush1.bf16.msra.mxu0 %v1790
    %1857 = vmatprep.subr.bf16.mxu0 %v1788
    %1858 = vmatpush1.bf16.msra.mxu0 %v1787
    %1859 = vmatprep.subr.bf16.mxu0 %v1785
    %1860 = vmatpush1.bf16.msra.mxu0 %v1784
    %1861 = vmatprep.subr.bf16.mxu0 %v1782
    %1862 = vmatpush1.bf16.msra.mxu0 %v1781
    %1863 = vmatprep.subr.bf16.mxu0 %v1779
    %1864 = vmatpush1.bf16.msra.mxu0 %v1778
    %1865 = vmatprep.subr.bf16.mxu0 %v1776
    %1866 = vmatpush1.bf16.msra.mxu0 %v1775
    %1867 = vmatprep.subr.bf16.mxu0 0
    %1868 = vmatpush2.bf16.msra.mxu0 0
    %1869 = vmatprep.subr.bf16.mxu0 0
    %1870 = vmatpush2.bf16.msra.mxu0 0
    %1871 = vmatprep.subr.bf16.mxu0 0
    %1872 = vmatpush2.bf16.msra.mxu0 0
    %1873 = vmatprep.subr.bf16.mxu0 0
    %1874 = vmatpush2.bf16.msra.mxu0 0
    %1875 = vmatprep.subr.bf16.mxu0 %v1809
    %1876 = vmatpush2.bf16.msra.mxu0 %v1808
    %1877 = vmatprep.subr.bf16.mxu0 %v1806
    %1878 = vmatpush2.bf16.msra.mxu0 %v1805
    %1879 = vmatprep.subr.bf16.mxu0 %v1803
    %1880 = vmatpush2.bf16.msra.mxu0 %v1802
    %1881 = vmatprep.subr.bf16.mxu0 %v1800
    %1882 = vmatpush2.bf16.msra.mxu0 %v1799
    %1883 = vmatprep.mubr.bf16.mxu0 %v1849
    %1884 = vmatmul.mubr.bf16.gmra.mxu0 %v1605
    %v1885 = vpop.f32.mrf.mxu0
    %v1886 = vadd.f32 0.0, %v1885
    %v1887 = vpop.f32.mrf.mxu0
    %v1888 = vadd.f32 0.0, %v1887
    %v1889 = vpop.f32.mrf.mxu0
    %v1890 = vpop.f32.mrf.mxu0
    %1891 = vdwg.mxu0
    %1892 = vmatprep.subr.bf16.mxu0 0
    %1893 = vmatpush1.bf16.msra.mxu0 %v1798
    %1894 = vmatprep.subr.bf16.mxu0 0
    %1895 = vmatpush1.bf16.msra.mxu0 %v1795
    %1896 = vmatprep.subr.bf16.mxu0 0
    %1897 = vmatpush1.bf16.msra.mxu0 %v1792
    %1898 = vmatprep.subr.bf16.mxu0 0
    %1899 = vmatpush1.bf16.msra.mxu0 %v1789
    %1900 = vmatprep.subr.bf16.mxu0 0
    %1901 = vmatpush1.bf16.msra.mxu0 %v1786
    %1902 = vmatprep.subr.bf16.mxu0 0
    %1903 = vmatpush1.bf16.msra.mxu0 %v1783
    %1904 = vmatprep.subr.bf16.mxu0 0
    %1905 = vmatpush1.bf16.msra.mxu0 %v1780
    %1906 = vmatprep.subr.bf16.mxu0 0
    %1907 = vmatpush1.bf16.msra.mxu0 %v1777
    %1908 = vmatprep.subr.bf16.mxu0 0
    %1909 = vmatpush2.bf16.msra.mxu0 0
    %1910 = vmatprep.subr.bf16.mxu0 0
    %1911 = vmatpush2.bf16.msra.mxu0 0
    %1912 = vmatprep.subr.bf16.mxu0 0
    %1913 = vmatpush2.bf16.msra.mxu0 0
    %1914 = vmatprep.subr.bf16.mxu0 0
    %1915 = vmatpush2.bf16.msra.mxu0 0
    %1916 = vmatprep.subr.bf16.mxu0 0
    %1917 = vmatpush2.bf16.msra.mxu0 %v1810
    %1918 = vmatprep.subr.bf16.mxu0 0
    %1919 = vmatpush2.bf16.msra.mxu0 %v1807
    %1920 = vmatprep.subr.bf16.mxu0 0
    %1921 = vmatpush2.bf16.msra.mxu0 %v1804
    %1922 = vmatprep.subr.bf16.mxu0 0
    %1923 = vmatpush2.bf16.msra.mxu0 %v1801
    %1924 = vmatprep.mubr.bf16.mxu0 %v1849
    %1925 = vmatmul.mubr.bf16.gmra.mxu0 %v1605
    %v1926 = vpop.f32.mrf.mxu0
    %v1927 = vadd.f32 0.0, %v1926
    %v1928 = vpop.f32.mrf.mxu0
    %v1929 = vpop.f32.mrf.mxu0
    %v1930 = vpop.f32.mrf.mxu0
    %1931 = vdwg.mxu0
    %v2028 = vunpack.c.l.b16 %v1509
    %v2029 = vunpack.c.h.b16 %v1509
    %v2030 = vunpack.c.l.b16 %v1510
    %v2031 = vunpack.c.l.b16 %v1511
    %v2032 = vunpack.c.h.b16 %v1511
    %v2033 = vunpack.c.l.b16 %v1512
    %v2034 = vunpack.c.l.b16 %v1513
    %v2035 = vunpack.c.h.b16 %v1513
    %v2036 = vunpack.c.l.b16 %v1514
    %v2037 = vunpack.c.l.b16 %v1515
    %v2038 = vunpack.c.h.b16 %v1515
    %v2039 = vunpack.c.l.b16 %v1516
    %v2040 = vunpack.c.l.b16 %v1517
    %v2041 = vunpack.c.h.b16 %v1517
    %v2042 = vunpack.c.l.b16 %v1518
    %v2043 = vunpack.c.l.b16 %v1519
    %v2044 = vunpack.c.h.b16 %v1519
    %v2045 = vunpack.c.l.b16 %v1520
    %v2046 = vunpack.c.l.b16 %v1521
    %v2047 = vunpack.c.h.b16 %v1521
    %v2048 = vunpack.c.l.b16 %v1522
    %v2049 = vunpack.c.l.b16 %v1523
    %v2050 = vunpack.c.h.b16 %v1523
    %v2051 = vunpack.c.l.b16 %v1524
    %v2052 = vunpack.c.l.b16 %v1525
    %v2053 = vunpack.c.h.b16 %v1525
    %v2054 = vunpack.c.l.b16 %v1526
    %v2055 = vunpack.c.l.b16 %v1527
    %v2056 = vunpack.c.h.b16 %v1527
    %v2057 = vunpack.c.l.b16 %v1528
    %v2058 = vunpack.c.l.b16 %v1529
    %v2059 = vunpack.c.h.b16 %v1529
    %v2060 = vunpack.c.l.b16 %v1530
    %v2061 = vunpack.c.l.b16 %v1531
    %v2062 = vunpack.c.h.b16 %v1531
    %v2063 = vunpack.c.l.b16 %v1532
    %v2064 = vunpack.c.l.b16 %v1533
    %v2065 = vunpack.c.h.b16 %v1533
    %v2066 = vunpack.c.l.b16 %v1534
    %v2067 = vunpack.c.l.b16 %v1535
    %v2068 = vunpack.c.h.b16 %v1535
    %v2069 = vunpack.c.l.b16 %v1536
    %v2070 = vunpack.c.l.b16 %v1537
    %v2071 = vunpack.c.h.b16 %v1537
    %v2072 = vunpack.c.l.b16 %v1538
    %v2073 = vunpack.c.l.b16 %v1539
    %v2074 = vunpack.c.h.b16 %v1539
    %v2075 = vunpack.c.l.b16 %v1540
    %v2076 = vunpack.c.l.b16 %v1541
    %v2077 = vunpack.c.h.b16 %v1541
    %v2078 = vunpack.c.l.b16 %v1542
    %v2079 = vunpack.c.l.b16 %v1543
    %v2080 = vunpack.c.h.b16 %v1543
    %v2081 = vunpack.c.l.b16 %v1544
    %v2082 = vunpack.c.l.b16 %v1545
    %v2083 = vunpack.c.h.b16 %v1545
    %v2084 = vunpack.c.l.b16 %v1546
    %v2085 = vunpack.c.l.b16 %v1547
    %v2086 = vunpack.c.h.b16 %v1547
    %v2087 = vunpack.c.l.b16 %v1548
    %v2088 = vunpack.c.l.b16 %v1549
    %v2089 = vunpack.c.h.b16 %v1549
    %v2090 = vunpack.c.l.b16 %v1550
    %v2091 = vunpack.c.l.b16 %v1551
    %v2092 = vunpack.c.h.b16 %v1551
    %v2093 = vunpack.c.l.b16 %v1552
    %v2094 = vunpack.c.l.b16 %v1553
    %v2095 = vunpack.c.h.b16 %v1553
    %v2096 = vunpack.c.l.b16 %v1554
    %v2097 = vunpack.c.l.b16 %v1555
    %v2098 = vunpack.c.h.b16 %v1555
    %v2099 = vunpack.c.l.b16 %v1556
    %v2100 = vunpack.c.l.b16 %v1557
    %v2101 = vunpack.c.h.b16 %v1557
    %v2102 = vunpack.c.l.b16 %v1558
    %v2103 = vunpack.c.l.b16 %v1559
    %v2104 = vunpack.c.h.b16 %v1559
    %v2105 = vunpack.c.l.b16 %v1560
    %v2106 = vunpack.c.l.b16 %v1561
    %v2107 = vunpack.c.h.b16 %v1561
    %v2108 = vunpack.c.l.b16 %v1562
    %v2109 = vunpack.c.l.b16 %v1563
    %v2110 = vunpack.c.h.b16 %v1563
    %v2111 = vunpack.c.l.b16 %v1564
    %v2112 = vunpack.c.l.b16 %v1565
    %v2113 = vunpack.c.h.b16 %v1565
    %v2114 = vunpack.c.l.b16 %v1566
    %v2115 = vunpack.c.l.b16 %v1567
    %v2116 = vunpack.c.h.b16 %v1567
    %v2117 = vunpack.c.l.b16 %v1568
    %v2118 = vunpack.c.l.b16 %v1569
    %v2119 = vunpack.c.h.b16 %v1569
    %v2120 = vunpack.c.l.b16 %v1570
    %v2121 = vunpack.c.l.b16 %v1571
    %v2122 = vunpack.c.h.b16 %v1571
    %v2123 = vunpack.c.l.b16 %v1572
    %v2124 = vunpack.c.l.b16 %v1573
    %v2125 = vunpack.c.h.b16 %v1573
    %v2126 = vunpack.c.l.b16 %v1574
    %v2127 = vunpack.c.l.b16 %v1575
    %v2128 = vunpack.c.h.b16 %v1575
    %v2129 = vunpack.c.l.b16 %v1576
    %v2130 = vunpack.c.l.b16 %v1577
    %v2131 = vunpack.c.h.b16 %v1577
    %v2132 = vunpack.c.l.b16 %v1578
    %v2133 = vunpack.c.l.b16 %v1579
    %v2134 = vunpack.c.h.b16 %v1579
    %v2135 = vunpack.c.l.b16 %v1580
    %v2136 = vunpack.c.l.b16 %v1581
    %v2137 = vunpack.c.h.b16 %v1581
    %v2138 = vunpack.c.l.b16 %v1582
    %v2139 = vunpack.c.l.b16 %v1583
    %v2140 = vunpack.c.h.b16 %v1583
    %v2141 = vunpack.c.l.b16 %v1584
    %v2142 = vunpack.c.l.b16 %v1585
    %v2143 = vunpack.c.h.b16 %v1585
    %v2144 = vunpack.c.l.b16 %v1586
    %v2145 = vunpack.c.l.b16 %v1587
    %v2146 = vunpack.c.h.b16 %v1587
    %v2147 = vunpack.c.l.b16 %v1588
    %v2148 = vunpack.c.l.b16 %v1589
    %v2149 = vunpack.c.h.b16 %v1589
    %v2150 = vunpack.c.l.b16 %v1590
    %v2151 = vunpack.c.l.b16 %v1591
    %v2152 = vunpack.c.h.b16 %v1591
    %v2153 = vunpack.c.l.b16 %v1592
    %v2154 = vunpack.c.l.b16 %v1593
    %v2155 = vunpack.c.h.b16 %v1593
    %v2156 = vunpack.c.l.b16 %v1594
    %v2157 = vunpack.c.l.b16 %v1595
    %v2158 = vunpack.c.h.b16 %v1595
    %v2159 = vunpack.c.l.b16 %v1596
    %v2160 = vunpack.c.l.b16 %v1597
    %v2161 = vunpack.c.h.b16 %v1597
    %v2162 = vunpack.c.l.b16 %v1598
    %v2163 = vunpack.c.l.b16 %v1599
    %v2164 = vunpack.c.h.b16 %v1599
    %v2165 = vunpack.c.l.b16 %v1600
    %v2166 = vunpack.c.l.b16 %v1601
    %v2167 = vunpack.c.h.b16 %v1601
    %v2168 = vunpack.c.l.b16 %v1602
    %v2169 = vunpack.c.l.b16 %v1603
    %v2170 = vunpack.c.h.b16 %v1603
    %v2171 = vunpack.c.l.b16 %v1604
    %v2172 = vpack.c.b16 %v2031, %v2028
    %v2173 = vpack.c.b16 %v2032, %v2029
    %v2174 = vpack.c.b16 %v2033, %v2030
    %v2175 = vpack.c.b16 %v2037, %v2034
    %v2176 = vpack.c.b16 %v2038, %v2035
    %v2177 = vpack.c.b16 %v2039, %v2036
    %v2178 = vpack.c.b16 %v2043, %v2040
    %v2179 = vpack.c.b16 %v2044, %v2041
    %v2180 = vpack.c.b16 %v2045, %v2042
    %v2181 = vpack.c.b16 %v2049, %v2046
    %v2182 = vpack.c.b16 %v2050, %v2047
    %v2183 = vpack.c.b16 %v2051, %v2048
    %v2184 = vpack.c.b16 %v2055, %v2052
    %v2185 = vpack.c.b16 %v2056, %v2053
    %v2186 = vpack.c.b16 %v2057, %v2054
    %v2187 = vpack.c.b16 %v2061, %v2058
    %v2188 = vpack.c.b16 %v2062, %v2059
    %v2189 = vpack.c.b16 %v2063, %v2060
    %v2190 = vpack.c.b16 %v2067, %v2064
    %v2191 = vpack.c.b16 %v2068, %v2065
    %v2192 = vpack.c.b16 %v2069, %v2066
    %v2193 = vpack.c.b16 %v2073, %v2070
    %v2194 = vpack.c.b16 %v2074, %v2071
    %v2195 = vpack.c.b16 %v2075, %v2072
    %v2196 = vpack.c.b16 %v2079, %v2076
    %v2197 = vpack.c.b16 %v2080, %v2077
    %v2198 = vpack.c.b16 %v2081, %v2078
    %v2199 = vpack.c.b16 %v2085, %v2082
    %v2200 = vpack.c.b16 %v2086, %v2083
    %v2201 = vpack.c.b16 %v2087, %v2084
    %v2202 = vpack.c.b16 %v2091, %v2088
    %v2203 = vpack.c.b16 %v2092, %v2089
    %v2204 = vpack.c.b16 %v2093, %v2090
    %v2205 = vpack.c.b16 %v2097, %v2094
    %v2206 = vpack.c.b16 %v2098, %v2095
    %v2207 = vpack.c.b16 %v2099, %v2096
    %v2208 = vpack.c.b16 %v2103, %v2100
    %v2209 = vpack.c.b16 %v2104, %v2101
    %v2210 = vpack.c.b16 %v2105, %v2102
    %v2211 = vpack.c.b16 %v2109, %v2106
    %v2212 = vpack.c.b16 %v2110, %v2107
    %v2213 = vpack.c.b16 %v2111, %v2108
    %v2214 = vpack.c.b16 %v2115, %v2112
    %v2215 = vpack.c.b16 %v2116, %v2113
    %v2216 = vpack.c.b16 %v2117, %v2114
    %v2217 = vpack.c.b16 %v2121, %v2118
    %v2218 = vpack.c.b16 %v2122, %v2119
    %v2219 = vpack.c.b16 %v2123, %v2120
    %v2220 = vpack.c.b16 %v2127, %v2124
    %v2221 = vpack.c.b16 %v2128, %v2125
    %v2222 = vpack.c.b16 %v2129, %v2126
    %v2223 = vpack.c.b16 %v2133, %v2130
    %v2224 = vpack.c.b16 %v2134, %v2131
    %v2225 = vpack.c.b16 %v2135, %v2132
    %v2226 = vpack.c.b16 %v2139, %v2136
    %v2227 = vpack.c.b16 %v2140, %v2137
    %v2228 = vpack.c.b16 %v2141, %v2138
    %v2229 = vpack.c.b16 %v2145, %v2142
    %v2230 = vpack.c.b16 %v2146, %v2143
    %v2231 = vpack.c.b16 %v2147, %v2144
    %v2232 = vpack.c.b16 %v2151, %v2148
    %v2233 = vpack.c.b16 %v2152, %v2149
    %v2234 = vpack.c.b16 %v2153, %v2150
    %v2235 = vpack.c.b16 %v2157, %v2154
    %v2236 = vpack.c.b16 %v2158, %v2155
    %v2237 = vpack.c.b16 %v2159, %v2156
    %v2238 = vpack.c.b16 %v2163, %v2160
    %v2239 = vpack.c.b16 %v2164, %v2161
    %v2240 = vpack.c.b16 %v2165, %v2162
    %v2241 = vpack.c.b16 %v2169, %v2166
    %v2242 = vpack.c.b16 %v2170, %v2167
    %v2243 = vpack.c.b16 %v2171, %v2168
    %2316 = vmatprep.subr.bf16.mxu0 %v2194
    %2317 = vmatpush1.bf16.msra.mxu0 %v2193
    %2318 = vmatprep.subr.bf16.mxu0 %v2191
    %2319 = vmatpush1.bf16.msra.mxu0 %v2190
    %2320 = vmatprep.subr.bf16.mxu0 %v2188
    %2321 = vmatpush1.bf16.msra.mxu0 %v2187
    %2322 = vmatprep.subr.bf16.mxu0 %v2185
    %2323 = vmatpush1.bf16.msra.mxu0 %v2184
    %2324 = vmatprep.subr.bf16.mxu0 %v2182
    %2325 = vmatpush1.bf16.msra.mxu0 %v2181
    %2326 = vmatprep.subr.bf16.mxu0 %v2179
    %2327 = vmatpush1.bf16.msra.mxu0 %v2178
    %2328 = vmatprep.subr.bf16.mxu0 %v2176
    %2329 = vmatpush1.bf16.msra.mxu0 %v2175
    %2330 = vmatprep.subr.bf16.mxu0 %v2173
    %2331 = vmatpush1.bf16.msra.mxu0 %v2172
    %2332 = vmatprep.subr.bf16.mxu0 %v2218
    %2333 = vmatpush2.bf16.msra.mxu0 %v2217
    %2334 = vmatprep.subr.bf16.mxu0 %v2215
    %2335 = vmatpush2.bf16.msra.mxu0 %v2214
    %2336 = vmatprep.subr.bf16.mxu0 %v2212
    %2337 = vmatpush2.bf16.msra.mxu0 %v2211
    %2338 = vmatprep.subr.bf16.mxu0 %v2209
    %2339 = vmatpush2.bf16.msra.mxu0 %v2208
    %2340 = vmatprep.subr.bf16.mxu0 %v2206
    %2341 = vmatpush2.bf16.msra.mxu0 %v2205
    %2342 = vmatprep.subr.bf16.mxu0 %v2203
    %2343 = vmatpush2.bf16.msra.mxu0 %v2202
    %2344 = vmatprep.subr.bf16.mxu0 %v2200
    %2345 = vmatpush2.bf16.msra.mxu0 %v2199
    %2346 = vmatprep.subr.bf16.mxu0 %v2197
    %2347 = vmatpush2.bf16.msra.mxu0 %v2196
    %2348 = vmatprep.mubr.bf16.mxu0 %v1507
    %2349 = vmatmul.mubr.bf16.gmra.mxu0 %v1506
    %v2350 = vpop.f32.mrf.mxu0
    %v2351 = vadd.f32 %v1886, %v2350
    %v2352 = vpop.f32.mrf.mxu0
    %v2353 = vadd.f32 %v1888, %v2352
    %v2354 = vpop.f32.mrf.mxu0
    %v2355 = vpop.f32.mrf.mxu0
    %2356 = vdwg.mxu0
    %2357 = vmatprep.subr.bf16.mxu0 %v2242
    %2358 = vmatpush1.bf16.msra.mxu0 %v2241
    %2359 = vmatprep.subr.bf16.mxu0 %v2239
    %2360 = vmatpush1.bf16.msra.mxu0 %v2238
    %2361 = vmatprep.subr.bf16.mxu0 %v2236
    %2362 = vmatpush1.bf16.msra.mxu0 %v2235
    %2363 = vmatprep.subr.bf16.mxu0 %v2233
    %2364 = vmatpush1.bf16.msra.mxu0 %v2232
    %2365 = vmatprep.subr.bf16.mxu0 %v2230
    %2366 = vmatpush1.bf16.msra.mxu0 %v2229
    %2367 = vmatprep.subr.bf16.mxu0 %v2227
    %2368 = vmatpush1.bf16.msra.mxu0 %v2226
    %2369 = vmatprep.subr.bf16.mxu0 %v2224
    %2370 = vmatpush1.bf16.msra.mxu0 %v2223
    %2371 = vmatprep.subr.bf16.mxu0 %v2221
    %2372 = vmatpush1.bf16.msra.mxu0 %v2220
    %2373 = vmatprep.subr.bf16.mxu0 0
    %2374 = vmatpush2.bf16.msra.mxu0 0
    %2375 = vmatprep.subr.bf16.mxu0 0
    %2376 = vmatpush2.bf16.msra.mxu0 0
    %2377 = vmatprep.subr.bf16.mxu0 0
    %2378 = vmatpush2.bf16.msra.mxu0 0
    %2379 = vmatprep.subr.bf16.mxu0 0
    %2380 = vmatpush2.bf16.msra.mxu0 0
    %2381 = vmatprep.subr.bf16.mxu0 0
    %2382 = vmatpush2.bf16.msra.mxu0 0
    %2383 = vmatprep.subr.bf16.mxu0 0
    %2384 = vmatpush2.bf16.msra.mxu0 0
    %2385 = vmatprep.subr.bf16.mxu0 0
    %2386 = vmatpush2.bf16.msra.mxu0 0
    %2387 = vmatprep.subr.bf16.mxu0 0
    %2388 = vmatpush2.bf16.msra.mxu0 0
    %2389 = vmatprep.mubr.bf16.mxu0 0
    %2390 = vmatmul.mubr.bf16.gmra.mxu0 %v1508
    %v2391 = vpop.f32.mrf.mxu0
    %v2392 = vadd.f32 %v2351, %v2391
    %v2393 = vpop.f32.mrf.mxu0
    %v2394 = vadd.f32 %v2353, %v2393
    %v2395 = vpop.f32.mrf.mxu0
    %v2396 = vpop.f32.mrf.mxu0
    %2397 = vdwg.mxu0
    %2398 = vmatprep.subr.bf16.mxu0 0
    %2399 = vmatpush1.bf16.msra.mxu0 %v2195
    %2400 = vmatprep.subr.bf16.mxu0 0
    %2401 = vmatpush1.bf16.msra.mxu0 %v2192
    %2402 = vmatprep.subr.bf16.mxu0 0
    %2403 = vmatpush1.bf16.msra.mxu0 %v2189
    %2404 = vmatprep.subr.bf16.mxu0 0
    %2405 = vmatpush1.bf16.msra.mxu0 %v2186
    %2406 = vmatprep.subr.bf16.mxu0 0
    %2407 = vmatpush1.bf16.msra.mxu0 %v2183
    %2408 = vmatprep.subr.bf16.mxu0 0
    %2409 = vmatpush1.bf16.msra.mxu0 %v2180
    %2410 = vmatprep.subr.bf16.mxu0 0
    %2411 = vmatpush1.bf16.msra.mxu0 %v2177
    %2412 = vmatprep.subr.bf16.mxu0 0
    %2413 = vmatpush1.bf16.msra.mxu0 %v2174
    %2414 = vmatprep.subr.bf16.mxu0 0
    %2415 = vmatpush2.bf16.msra.mxu0 %v2219
    %2416 = vmatprep.subr.bf16.mxu0 0
    %2417 = vmatpush2.bf16.msra.mxu0 %v2216
    %2418 = vmatprep.subr.bf16.mxu0 0
    %2419 = vmatpush2.bf16.msra.mxu0 %v2213
    %2420 = vmatprep.subr.bf16.mxu0 0
    %2421 = vmatpush2.bf16.msra.mxu0 %v2210
    %2422 = vmatprep.subr.bf16.mxu0 0
    %2423 = vmatpush2.bf16.msra.mxu0 %v2207
    %2424 = vmatprep.subr.bf16.mxu0 0
    %2425 = vmatpush2.bf16.msra.mxu0 %v2204
    %2426 = vmatprep.subr.bf16.mxu0 0
    %2427 = vmatpush2.bf16.msra.mxu0 %v2201
    %2428 = vmatprep.subr.bf16.mxu0 0
    %2429 = vmatpush2.bf16.msra.mxu0 %v2198
    %2430 = vmatprep.mubr.bf16.mxu0 %v1507
    %2431 = vmatmul.mubr.bf16.gmra.mxu0 %v1506
    %v2432 = vpop.f32.mrf.mxu0
    %v2433 = vadd.f32 %v1927, %v2432
    %v2434 = vpop.f32.mrf.mxu0
    %v2435 = vpop.f32.mrf.mxu0
    %v2436 = vpop.f32.mrf.mxu0
    %2437 = vdwg.mxu0
    %2438 = vmatprep.subr.bf16.mxu0 0
    %2439 = vmatpush1.bf16.msra.mxu0 %v2243
    %2440 = vmatprep.subr.bf16.mxu0 0
    %2441 = vmatpush1.bf16.msra.mxu0 %v2240
    %2442 = vmatprep.subr.bf16.mxu0 0
    %2443 = vmatpush1.bf16.msra.mxu0 %v2237
    %2444 = vmatprep.subr.bf16.mxu0 0
    %2445 = vmatpush1.bf16.msra.mxu0 %v2234
    %2446 = vmatprep.subr.bf16.mxu0 0
    %2447 = vmatpush1.bf16.msra.mxu0 %v2231
    %2448 = vmatprep.subr.bf16.mxu0 0
    %2449 = vmatpush1.bf16.msra.mxu0 %v2228
    %2450 = vmatprep.subr.bf16.mxu0 0
    %2451 = vmatpush1.bf16.msra.mxu0 %v2225
    %2452 = vmatprep.subr.bf16.mxu0 0
    %2453 = vmatpush1.bf16.msra.mxu0 %v2222
    %2454 = vmatprep.subr.bf16.mxu0 0
    %2455 = vmatpush2.bf16.msra.mxu0 0
    %2456 = vmatprep.subr.bf16.mxu0 0
    %2457 = vmatpush2.bf16.msra.mxu0 0
    %2458 = vmatprep.subr.bf16.mxu0 0
    %2459 = vmatpush2.bf16.msra.mxu0 0
    %2460 = vmatprep.subr.bf16.mxu0 0
    %2461 = vmatpush2.bf16.msra.mxu0 0
    %2462 = vmatprep.subr.bf16.mxu0 0
    %2463 = vmatpush2.bf16.msra.mxu0 0
    %2464 = vmatprep.subr.bf16.mxu0 0
    %2465 = vmatpush2.bf16.msra.mxu0 0
    %2466 = vmatprep.subr.bf16.mxu0 0
    %2467 = vmatpush2.bf16.msra.mxu0 0
    %2468 = vmatprep.subr.bf16.mxu0 0
    %2469 = vmatpush2.bf16.msra.mxu0 0
    %2470 = vmatprep.mubr.bf16.mxu0 0
    %2471 = vmatmul.mubr.bf16.gmra.mxu0 %v1508
    %v2472 = vpop.f32.mrf.mxu0
    %v2473 = vadd.f32 %v2433, %v2472
    %v2474 = vpop.f32.mrf.mxu0
    %v2475 = vpop.f32.mrf.mxu0
    %v2476 = vpop.f32.mrf.mxu0
    %2477 = vdwg.mxu0
    %v2478 = vld [vmem:[#allocation13] sm:$0x7]
    %v2480 = vlaneseq
    %v2481 = vshrl.u32 %v2480, 7
    %v2482 = vsub.s32 0, %v2481
    %v2483 = vrot.slane %v2478, %v2482
    %v2484 = vlaneseq
    %v2485 = vshrl.u32 %v2484, 7
    %v2486 = vsub.s32 1, %v2485
    %v2487 = vrot.slane %v2478, %v2486
    %v2488 = vlaneseq
    %v2489 = vshrl.u32 %v2488, 7
    %v2490 = vsub.s32 2, %v2489
    %v2491 = vrot.slane %v2478, %v2490
    %v2495 = vadd.f32 %v2392, %v2483
    %v2496 = vadd.f32 %v2394, %v2487
    %v2497 = vadd.f32 %v2473, %v2491
    %vm2498 = vcmask 1041408
    %v2499 = vsel %vm2498, %v2495, 0.0
    %v2500 = vsel %vm2498, %v2496, 0.0
    %v2501 = vadd.f32 %v2499, %v2500
    %v2502 = vsel %vm2498, %v2497, 0.0
    %v2503 = vadd.f32 %v2501, %v2502
    %2504 = vadd.xlane.f32.xlu0 %v2503
    %v2505 = vpop.xlane.xlu0 %2504
    %v2506 = vrcp.pop 384.0
    %v2507 = vmul.f32 %v2505, %v2506
    %v2508 = vsub.f32 %v2495, %v2507
    %v2509 = vsub.f32 %v2496, %v2507
    %v2510 = vsub.f32 %v2497, %v2507
    %v2511 = vmul.f32 %v2508, %v2508
    %v2512 = vmul.f32 %v2509, %v2509
    %v2513 = vmul.f32 %v2510, %v2510
    %v2514 = vsel %vm2498, %v2511, 0.0
    %v2515 = vsel %vm2498, %v2512, 0.0
    %v2516 = vadd.f32 %v2514, %v2515
    %v2517 = vsel %vm2498, %v2513, 0.0
    %v2518 = vadd.f32 %v2516, %v2517
    %2519 = vadd.xlane.f32.xlu0 %v2518
    %v2520 = vpop.xlane.xlu0 %2519
    %v2521 = vmul.f32 %v2520, %v2506
    %v2522 = vadd.f32 %v2521, 1e-05
    %v2523 = vrsqrt.pop %v2522
    %v2524 = vmul.f32 %v2508, %v2523
    %v2525 = vmul.f32 %v2509, %v2523
    %v2526 = vmul.f32 %v2510, %v2523
    %v2527 = vld [vmem:[#allocation14] sm:$0x7]
    %v2529 = vlaneseq
    %v2530 = vshrl.u32 %v2529, 7
    %v2531 = vsub.s32 0, %v2530
    %v2532 = vrot.slane %v2527, %v2531
    %v2533 = vlaneseq
    %v2534 = vshrl.u32 %v2533, 7
    %v2535 = vsub.s32 1, %v2534
    %v2536 = vrot.slane %v2527, %v2535
    %v2537 = vlaneseq
    %v2538 = vshrl.u32 %v2537, 7
    %v2539 = vsub.s32 2, %v2538
    %v2540 = vrot.slane %v2527, %v2539
    %v2544 = vmul.f32 %v2524, %v2532
    %v2545 = vmul.f32 %v2525, %v2536
    %v2546 = vmul.f32 %v2526, %v2540
    %v2547 = vld [vmem:[#allocation16] sm:$0x7]
    %v2549 = vlaneseq
    %v2550 = vshrl.u32 %v2549, 7
    %v2551 = vsub.s32 0, %v2550
    %v2552 = vrot.slane %v2547, %v2551
    %v2553 = vlaneseq
    %v2554 = vshrl.u32 %v2553, 7
    %v2555 = vsub.s32 1, %v2554
    %v2556 = vrot.slane %v2547, %v2555
    %v2557 = vlaneseq
    %v2558 = vshrl.u32 %v2557, 7
    %v2559 = vsub.s32 2, %v2558
    %v2560 = vrot.slane %v2547, %v2559
    %v2564 = vadd.f32 %v2544, %v2552
    %v2565 = vadd.f32 %v2545, %v2556
    %v2566 = vadd.f32 %v2546, %v2560
    %v2570 = vcombine.low %v2564, %v2565
    %v2572 = vunpack.c.l.s4 1983009808
    %v2573 = vunpack.c.0.s8 %v2572
    %v2574 = vlaneseq
    %v2575 = vshrl.u32 %v2574, 7
    %v2576 = vsub.s32 %v2573, %v2575
    %v2577 = vrot.slane %v2570, %v2576
    %v2579 = vunpack.c.l.s4 1983009808
    %v2580 = vunpack.c.0.s8 %v2579
    %v2581 = vlaneseq
    %v2582 = vshrl.u32 %v2581, 7
    %v2583 = vsub.s32 %v2580, %v2582
    %v2584 = vrot.slane %v2566, %v2583
    %v2585 = vcombine.low %v2577, %v2584
    %2587 = vst [vmem:[#allocation17] sm:$0x3f] %v2585
    // Predicated region
    $region82: #{semiotic_extractor_forward.1} parent=1 // pred_check
      _
    $region83: #{semiotic_extractor_forward.1} parent=1 // pred_check_branch
      %2589 = sbr.rel (0) target = $region85
    $region84: #{semiotic_extractor_forward.1} parent=1 // pred_region
      %s2591 = ssub.s32 96, 96
      %2592 = vsyncadd [#allocation4], %s2591
      %s2594 = sshll.u32 [#allocation17], 4
      %s2595 = int_to_ptr.vmem [resolvable:$true] %s2594
      %2597 = dma.vmem_to_hbm [thread:$0]  %s2595, 96, %s11, [#allocation4]
    $region85: #{semiotic_extractor_forward.1} parent=1 // pred_fallthru
      _
    // Predicated region
    $region86: #{semiotic_extractor_forward.1} parent=1 // pred_check
      _
    $region87: #{semiotic_extractor_forward.1} parent=1 // pred_check_branch
      %2599 = sbr.rel (0) target = $region89
    $region88: #{semiotic_extractor_forward.1} parent=1 // pred_region
      %2600 = dma.done [#allocation4], 96
    $region89: #{semiotic_extractor_forward.1} parent=1 // pred_fallthru
      _
    %2601 = vsyncpa [#allocation3], 1
    %2602 = vsyncpa [#allocation6], 1
    %2603 = vsyncpa [#allocation9], 1
    %2604 = vsyncpa [#allocation12], 1
    %2605 = vsyncpa [#allocation15], 1
    %2606 = vsyncpa [#allocation4], 1

</llo_original>
